<compile_context>
chip_gen: v7x
topology: tpu7x:2x2x1
jax: 0.10.0
libtpu: 0.0.40
codegen_flags: <defaults>
</compile_context>

<pallas_src>
import math

import jax
import jax.numpy as jnp
from jax.experimental import pallas as pl
from jax.experimental.pallas import tpu as pltpu  # noqa: F401  (TPU backend)

# ----------------------------- configuration --------------------------------
VOCAB = 100        # synthetic vocab
MAX_POS = 16       # synthetic max positions
H = 32             # transformer hidden_size (AutoModel.config.hidden_size)
NH = 2             # attention heads
DH = H // NH       # head dim
FFN = 64           # feed-forward dim
HD = 32            # LSTM hidden_dim (module default 256, scaled down)
NUM_LABELS = 2
LN_EPS = 1e-12
LANE_PAD = 128     # lane-dense padding for the classifier output
SUB_PAD = 8        # sublane padding for the classifier output
G2 = 8 * HD        # 4 gates x 2 directions = 256 lanes (interleaved layout)

# packed-slab lane offsets
# w_h_slab  (H, 192):  [ Wq|Wk|Wv : 0..95 | Wo : 96..127 | W1 : 128..191 ]
WH_QKV0, WH_WO0, WH_W10, WH_END = 0, 3 * H, 4 * H, 4 * H + FFN
# w_64_slab (72, 672): [ W_ih : 0..255 | W_hh : 256..511 | Wc : 512..639 | W2 : 640..671 ]
W64_IH0, W64_HH0, W64_C0, W64_W20, W64_END = 0, G2, 2 * G2, 2 * G2 + LANE_PAD, 2 * G2 + LANE_PAD + H


def _layer_norm(x, g, b):
    mu = jnp.mean(x, axis=-1, keepdims=True)
    var = jnp.mean((x - mu) ** 2, axis=-1, keepdims=True)
    return (x - mu) * jax.lax.rsqrt(var + LN_EPS) * g + b


# ----------------------- fused encoder + BiLSTM + head ----------------------
def make_fused_kernel(B, S, out_rows):
    BS = B * S

    def fused_kernel(x_ref, ab_ref, wh_ref, w64_ref, bvec_ref, out_ref):
        x2 = x_ref[...]          # (BS, H)       activations
        ab = ab_ref[...]         # (BS, BS)      additive attention bias
        wh = wh_ref[...]         # (H, 192)      packed H-row weights
        w64 = w64_ref[...]       # (72, 672)     packed 64-row weights + LSTM bias row
        bv = bvec_ref[...]       # (16, 128)     packed biases / LN params

        # ---- static slices of the packed slabs ------------------------------
        w_qkv = wh[:, WH_QKV0:WH_WO0]               # (H, 3H)
        w_o = wh[:, WH_WO0:WH_W10]                  # (H, H)
        w_1 = wh[:, WH_W10:WH_END]                  # (H, FFN)
        w_ih = w64[0:2 * H, W64_IH0:W64_HH0]        # (2H, 8*HD)
        w_hh = w64[0:2 * HD, W64_HH0:W64_C0]        # (2*HD, 8*HD)
        w_c = w64[0:2 * HD, W64_C0:W64_W20]         # (2*HD, 128)
        w_2 = w64[0:FFN, W64_W20:W64_END]           # (FFN, H)
        b_lstm = w64[64:65, W64_IH0:W64_HH0]        # (1, 8*HD)

        b_qkv = bv[0:1, 0:3 * H]
        b_o = bv[1:2, 0:H]
        g1 = bv[2:3, 0:H]
        be1 = bv[3:4, 0:H]
        b_1 = bv[4:5, 0:FFN]
        b_2 = bv[5:6, 0:H]
        g2 = bv[6:7, 0:H]
        be2 = bv[7:8, 0:H]
        b_c = bv[8:9, :]                            # (1, 128)

        # ---------------- encoder: multi-head self-attention -----------------
        qkv = jnp.dot(x2, w_qkv, preferred_element_type=jnp.float32) + b_qkv   # (BS, 3H)
        scale = 1.0 / math.sqrt(DH)
        attn = jnp.zeros((BS, H), jnp.float32)
        for h in range(NH):                         # static unroll over heads
            q_h = qkv[:, h * DH:(h + 1) * DH]
            k_h = qkv[:, H + h * DH:H + (h + 1) * DH]
            v_h = qkv[:, 2 * H + h * DH:2 * H + (h + 1) * DH]
            # flattened (BS, BS) scores; `ab` carries batch separation + mask
            # (-1e9 off-block -> exp underflows to exactly 0 in f32)
            s = jax.lax.dot_general(q_h, k_h, (((1,), (1,)), ((), ())),
                                    preferred_element_type=jnp.float32) * scale + ab
            p = jax.nn.softmax(s, axis=-1)
            ctx = jnp.dot(p, v_h, preferred_element_type=jnp.float32)          # (BS, DH)
            # fold head directly into the output projection (no lane concat)
            attn = attn + jnp.dot(ctx, w_o[h * DH:(h + 1) * DH, :],
                                  preferred_element_type=jnp.float32)
        attn = attn + b_o

        h1 = _layer_norm(x2 + attn, g1, be1)
        # TODO(synk): jax.nn.gelu default (tanh approx) != HF BERT exact erf GELU;
        # the encoder is synthetic, so exact-erf parity is immaterial here.
        ff = jnp.dot(jax.nn.gelu(jnp.dot(h1, w_1, preferred_element_type=jnp.float32) + b_1),
                     w_2, preferred_element_type=jnp.float32) + b_2
        enc = _layer_norm(h1 + ff, g2, be2)                                     # (BS, H)

        # -------------------------------- BiLSTM -----------------------------
        # Build [enc | enc_time_reversed] ONCE so a single matmul produces the
        # hoisted input-gate terms for BOTH directions, already in the
        # interleaved gate layout [i_f|i_b|f_f|f_b|g_f|g_b|o_f|o_b].
        enc3 = enc.reshape(B, S, H)
        enc_rev = jnp.concatenate(
            [enc3[:, S - 1 - t:S - t, :] for t in range(S)], axis=1).reshape(BS, H)
        enc_cat = jnp.concatenate([enc, enc_rev], axis=-1)                      # (BS, 2H)
        gx = (jnp.dot(enc_cat, w_ih, preferred_element_type=jnp.float32)
              + b_lstm).reshape(B, S, G2)                                       # (B, S, 8*HD)

        h_cat = jnp.zeros((B, 2 * HD), jnp.float32)   # [h_f | h_b]
        c_cat = jnp.zeros((B, 2 * HD), jnp.float32)   # [c_f | c_b]
        h_f0 = h_cat[:, 0:HD]
        for t in range(S):                            # static unroll (S fixed & small)
            # one recurrent matmul drives both directions (block-structured W_hh)
            gs = jnp.dot(h_cat, w_hh, preferred_element_type=jnp.float32) + gx[:, t, :]
            i_g = jax.nn.sigmoid(gs[:, 0:2 * HD])     # PyTorch gate order i, f, g, o
            f_g = jax.nn.sigmoid(gs[:, 2 * HD:4 * HD])
            g_g = jnp.tanh(gs[:, 4 * HD:6 * HD])
            o_g = jax.nn.sigmoid(gs[:, 6 * HD:8 * HD])
            c_cat = f_g * c_cat + i_g * g_g
            h_cat = o_g * jnp.tanh(c_cat)             # comes out as [h_f | h_b]
            if t == 0:
                h_f0 = h_cat[:, 0:HD]                 # fwd hidden at seq position 0
        # pooled = lstm_output[:, 0, :] = [h_fwd(t=0) | h_bwd(t=0) = final bwd state]
        pooled = jnp.concatenate([h_f0, h_cat[:, HD:2 * HD]], axis=-1)          # (B, 2*HD)

        # ------------- classifier (full (8,128) unmasked store) --------------
        # dropout(p=0.3) is identity at inference (PyTorch eval semantics)
        pad_rows = out_rows - B
        if pad_rows:
            pooled = jnp.concatenate(
                [pooled, jnp.zeros((pad_rows, 2 * HD), jnp.float32)], axis=0)   # (8, 2*HD)
        out_ref[...] = (jnp.dot(pooled, w_c, preferred_element_type=jnp.float32)
                        + b_c).astype(out_ref.dtype)

    return fused_kernel


# ------------------------------ parameters ----------------------------------
def init_params(key):
    def nrm(k, shape, scale=0.02):
        return scale * jax.random.normal(k, shape, dtype=jnp.float32)

    ks = iter(jax.random.split(key, 32))
    p = {}
    # embeddings (XLA glue, not the kernel hot path)
    p["word_emb"] = nrm(next(ks), (VOCAB, H))
    p["pos_emb"] = nrm(next(ks), (MAX_POS, H))
    p["emb_ln_g"] = jnp.ones((H,), jnp.float32)
    p["emb_ln_b"] = jnp.zeros((H,), jnp.float32)

    # ---- H-row weight slab: [Wq|Wk|Wv | Wo | W1] (stored for x @ W) ---------
    wq, wk, wv, wo = (nrm(next(ks), (H, H)) for _ in range(4))
    w1 = nrm(next(ks), (H, FFN))
    p["w_h_slab"] = jnp.concatenate([wq, wk, wv, wo, w1], axis=1)   # (H, 192)
    w2 = nrm(next(ks), (FFN, H))

    # ---- bias / LayerNorm slab (16, 128) ------------------------------------
    bq, bk, bv_, bo = (nrm(next(ks), (H,)) for _ in range(4))
    b1 = nrm(next(ks), (FFN,))
    b2 = nrm(next(ks), (H,))
    bias = jnp.zeros((16, LANE_PAD), jnp.float32)
    bias = bias.at[0, 0:3 * H].set(jnp.concatenate([bq, bk, bv_]))  # b_qkv
    bias = bias.at[1, 0:H].set(bo)                                  # b_o
    bias = bias.at[2, 0:H].set(1.0)                                 # ln1 gamma
    # row 3: ln1 beta = 0
    bias = bias.at[4, 0:FFN].set(b1)                                # b_1
    bias = bias.at[5, 0:H].set(b2)                                  # b_2
    bias = bias.at[6, 0:H].set(1.0)                                 # ln2 gamma
    # row 7: ln2 beta = 0

    # ---- BiLSTM (PyTorch nn.LSTM shapes) in gate-interleaved layout ---------
    G = 4 * HD
    w_ih_cat = jnp.zeros((2 * H, G2), jnp.float32)    # input is [enc | enc_rev]
    w_hh_cat = jnp.zeros((2 * HD, G2), jnp.float32)   # input is [h_f | h_b]
    b_lstm = jnp.zeros((G2,), jnp.float32)
    for d in range(2):                                # 0 = forward, 1 = backward
        wih = nrm(next(ks), (G, H))                   # weight_ih_l0 / _reverse
        whh = nrm(next(ks), (G, HD))                  # weight_hh_l0 / _reverse
        bsum = nrm(next(ks), (G,)) + nrm(next(ks), (G,))   # b_ih + b_hh
        wih_t, whh_t = wih.T, whh.T                   # converted for x @ W
        for g in range(4):                            # PyTorch gate order i, f, g, o
            col = g * 2 * HD + d * HD                 # interleaved [.._f | .._b]
            w_ih_cat = w_ih_cat.at[d * H:(d + 1) * H, col:col + HD].set(
                wih_t[:, g * HD:(g + 1) * HD])
            w_hh_cat = w_hh_cat.at[d * HD:(d + 1) * HD, col:col + HD].set(
                whh_t[:, g * HD:(g + 1) * HD])
            b_lstm = b_lstm.at[col:col + HD].set(bsum[g * HD:(g + 1) * HD])

    # ---- classifier nn.Linear(2*HD, NUM_LABELS), lane-padded to 128 ---------
    wc = nrm(next(ks), (NUM_LABELS, 2 * HD))
    bc = nrm(next(ks), (NUM_LABELS,))
    wc_pad = jnp.zeros((2 * HD, LANE_PAD), jnp.float32).at[:, 0:NUM_LABELS].set(wc.T)
    bias = bias.at[8, 0:NUM_LABELS].set(bc)
    p["bias_slab"] = bias

    # ---- 64-row weight slab: [W_ih | W_hh | Wc | W2] + LSTM bias row --------
    w64 = jnp.zeros((72, W64_END), jnp.float32)
    w64 = w64.at[0:2 * H, W64_IH0:W64_HH0].set(w_ih_cat)
    w64 = w64.at[0:2 * HD, W64_HH0:W64_C0].set(w_hh_cat)
    w64 = w64.at[0:2 * HD, W64_C0:W64_W20].set(wc_pad)
    w64 = w64.at[0:FFN, W64_W20:W64_END].set(w2)
    w64 = w64.at[64, W64_IH0:W64_HH0].set(b_lstm)
    p["w_64_slab"] = w64
    return p


# ------------------------------- forward ------------------------------------
def forward(params, input_ids, attention_mask):
    B, S = input_ids.shape
    # ---- XLA glue: embedding gather + embedding LayerNorm (not hot path) ----
    emb = params["word_emb"][input_ids] + params["pos_emb"][None, :S, :]
    mu = jnp.mean(emb, axis=-1, keepdims=True)
    var = jnp.mean((emb - mu) ** 2, axis=-1, keepdims=True)
    emb = (emb - mu) * jax.lax.rsqrt(var + LN_EPS) * params["emb_ln_g"] \
          + params["emb_ln_b"]
    x2 = emb.reshape(B * S, H)                # fold batch into sublanes

    # ---- precomputed (B*S, B*S) additive attention bias ----------------------
    # 0 where (same batch) & (key not padded), -1e9 elsewhere: encodes both the
    # block-diagonal batch structure of the flattened attention and the mask.
    same = jnp.eye(B, dtype=bool)[:, None, :, None]              # (B,1,B,1)
    keyok = (attention_mask > 0)[None, None, :, :]               # (1,1,B,S)
    allow = jnp.broadcast_to(jnp.logical_and(same, keyok),
                             (B, S, B, S)).reshape(B * S, B * S)
    attn_bias = jnp.where(allow, 0.0, -1e9).astype(jnp.float32)

    # single fused kernel: grid-free, single-TensorCore (the whole problem is
    # ~0.3 MiB of VMEM; a grid or a v7x core split would be pure overhead here).
    out_rows = max(SUB_PAD, ((B + 7) // 8) * 8)
    logits_pad = pl.pallas_call(
        make_fused_kernel(B, S, out_rows),
        out_shape=jax.ShapeDtypeStruct((out_rows, LANE_PAD), jnp.float32),
    )(x2, attn_bias, params["w_h_slab"], params["w_64_slab"], params["bias_slab"])
    return logits_pad[:B, :NUM_LABELS]        # strip sublane + lane padding


# --------------------------------- main --------------------------------------
if __name__ == "__main__":
    key = jax.random.PRNGKey(0)
    pkey, ikey = jax.random.split(key)
    params = init_params(pkey)

    B, S = 2, 8
    input_ids = jax.random.randint(ikey, (B, S), 0, VOCAB, dtype=jnp.int32)
    attention_mask = jnp.array([[1, 1, 1, 1, 1, 1, 1, 1],
                                [1, 1, 1, 1, 1, 1, 0, 0]], dtype=jnp.int32)

    logits = jax.jit(forward)(params, input_ids, attention_mask)
    jax.block_until_ready(logits)
    assert logits.shape == (B, NUM_LABELS) and logits.dtype == jnp.float32
    print("KERNEL_OK")
</pallas_src>

<mosaic_0001>
module attributes {stable_mosaic.version = 11 : i64} {
  func.func @fused_kernel(%arg0: memref<16x32xf32, #tpu.memory_space<vmem>>, %arg1: memref<16x16xf32, #tpu.memory_space<vmem>>, %arg2: memref<32x192xf32, #tpu.memory_space<vmem>>, %arg3: memref<72x672xf32, #tpu.memory_space<vmem>>, %arg4: memref<16x128xf32, #tpu.memory_space<vmem>>, %arg5: memref<8x128xf32, #tpu.memory_space<vmem>>) attributes {dimension_semantics = [], scalar_prefetch = 0 : i64, scratch_operands = 0 : i64, tpu.core_type = #tpu.core_type<tc>} {
    %c0 = arith.constant 0 : index
    %c0_0 = arith.constant 0 : index
    %0 = vector.load %arg0[%c0, %c0_0] : memref<16x32xf32, #tpu.memory_space<vmem>>, vector<16x32xf32>
    %c0_1 = arith.constant 0 : index
    %c0_2 = arith.constant 0 : index
    %1 = vector.load %arg1[%c0_1, %c0_2] : memref<16x16xf32, #tpu.memory_space<vmem>>, vector<16x16xf32>
    %c0_3 = arith.constant 0 : index
    %c0_4 = arith.constant 0 : index
    %2 = vector.load %arg2[%c0_3, %c0_4] : memref<32x192xf32, #tpu.memory_space<vmem>>, vector<32x192xf32>
    %c0_5 = arith.constant 0 : index
    %c0_6 = arith.constant 0 : index
    %3 = vector.load %arg3[%c0_5, %c0_6] : memref<72x672xf32, #tpu.memory_space<vmem>>, vector<72x672xf32>
    %c0_7 = arith.constant 0 : index
    %c0_8 = arith.constant 0 : index
    %4 = vector.load %arg4[%c0_7, %c0_8] : memref<16x128xf32, #tpu.memory_space<vmem>>, vector<16x128xf32>
    %5 = vector.extract_strided_slice %2 {offsets = [0, 0], sizes = [32, 96], strides = [1, 1]} : vector<32x192xf32> to vector<32x96xf32>
    %6 = vector.extract_strided_slice %2 {offsets = [0, 96], sizes = [32, 32], strides = [1, 1]} : vector<32x192xf32> to vector<32x32xf32>
    %7 = vector.extract_strided_slice %2 {offsets = [0, 128], sizes = [32, 64], strides = [1, 1]} : vector<32x192xf32> to vector<32x64xf32>
    %8 = vector.extract_strided_slice %3 {offsets = [0, 0], sizes = [64, 256], strides = [1, 1]} : vector<72x672xf32> to vector<64x256xf32>
    %9 = vector.extract_strided_slice %3 {offsets = [0, 256], sizes = [64, 256], strides = [1, 1]} : vector<72x672xf32> to vector<64x256xf32>
    %10 = vector.extract_strided_slice %3 {offsets = [0, 512], sizes = [64, 128], strides = [1, 1]} : vector<72x672xf32> to vector<64x128xf32>
    %11 = vector.extract_strided_slice %3 {offsets = [0, 640], sizes = [64, 32], strides = [1, 1]} : vector<72x672xf32> to vector<64x32xf32>
    %12 = vector.extract_strided_slice %3 {offsets = [64, 0], sizes = [1, 256], strides = [1, 1]} : vector<72x672xf32> to vector<1x256xf32>
    %13 = vector.extract_strided_slice %4 {offsets = [0, 0], sizes = [1, 96], strides = [1, 1]} : vector<16x128xf32> to vector<1x96xf32>
    %14 = vector.extract_strided_slice %4 {offsets = [1, 0], sizes = [1, 32], strides = [1, 1]} : vector<16x128xf32> to vector<1x32xf32>
    %15 = vector.extract_strided_slice %4 {offsets = [2, 0], sizes = [1, 32], strides = [1, 1]} : vector<16x128xf32> to vector<1x32xf32>
    %16 = vector.extract_strided_slice %4 {offsets = [3, 0], sizes = [1, 32], strides = [1, 1]} : vector<16x128xf32> to vector<1x32xf32>
    %17 = vector.extract_strided_slice %4 {offsets = [4, 0], sizes = [1, 64], strides = [1, 1]} : vector<16x128xf32> to vector<1x64xf32>
    %18 = vector.extract_strided_slice %4 {offsets = [5, 0], sizes = [1, 32], strides = [1, 1]} : vector<16x128xf32> to vector<1x32xf32>
    %19 = vector.extract_strided_slice %4 {offsets = [6, 0], sizes = [1, 32], strides = [1, 1]} : vector<16x128xf32> to vector<1x32xf32>
    %20 = vector.extract_strided_slice %4 {offsets = [7, 0], sizes = [1, 32], strides = [1, 1]} : vector<16x128xf32> to vector<1x32xf32>
    %21 = vector.extract_strided_slice %4 {offsets = [8, 0], sizes = [1, 128], strides = [1, 1]} : vector<16x128xf32> to vector<1x128xf32>
    %cst = arith.constant dense<0.000000e+00> : vector<16x96xf32>
    %22 = tpu.matmul %0, %5, %cst {dimension_numbers = #tpu.dot_dimension_numbers<[1], [0], [0], [1], [0, 0, 1, 1], [], []>} : vector<16x32xf32>, vector<32x96xf32>, vector<16x96xf32> -> vector<16x96xf32>
    %23 = vector.broadcast %13 : vector<1x96xf32> to vector<16x96xf32>
    %24 = arith.addf %22, %23 : vector<16x96xf32>
    %cst_9 = arith.constant 0.000000e+00 : f32
    %25 = vector.broadcast %cst_9 : f32 to vector<16x32xf32>
    %26 = vector.extract_strided_slice %24 {offsets = [0, 0], sizes = [16, 16], strides = [1, 1]} : vector<16x96xf32> to vector<16x16xf32>
    %27 = vector.extract_strided_slice %24 {offsets = [0, 32], sizes = [16, 16], strides = [1, 1]} : vector<16x96xf32> to vector<16x16xf32>
    %28 = vector.extract_strided_slice %24 {offsets = [0, 64], sizes = [16, 16], strides = [1, 1]} : vector<16x96xf32> to vector<16x16xf32>
    %cst_10 = arith.constant dense<0.000000e+00> : vector<16x16xf32>
    %29 = tpu.matmul %26, %27, %cst_10 {dimension_numbers = #tpu.dot_dimension_numbers<[1], [1], [0], [0], [0, 0, 1, 0], [], []>} : vector<16x16xf32>, vector<16x16xf32>, vector<16x16xf32> -> vector<16x16xf32>
    %cst_11 = arith.constant 2.500000e-01 : f32
    %30 = vector.broadcast %cst_11 : f32 to vector<16x16xf32>
    %31 = arith.mulf %29, %30 : vector<16x16xf32>
    %32 = arith.addf %31, %1 : vector<16x16xf32>
    %cst_12 = arith.constant dense<0xFF800000> : vector<16xf32>
    %33 = vector.multi_reduction <maximumf>, %32, %cst_12 [1] : vector<16x16xf32> to vector<16xf32>
    %cst_13 = arith.constant 0xFF800000 : f32
    %34 = vector.broadcast %cst_13 : f32 to vector<16xf32>
    %35 = arith.maximumf %34, %33 : vector<16xf32>
    %36 = vector.shape_cast %35 : vector<16xf32> to vector<16x1xf32>
    %37 = vector.broadcast %36 : vector<16x1xf32> to vector<16x16xf32>
    %38 = arith.subf %32, %37 : vector<16x16xf32>
    %39 = math.exp %38 : vector<16x16xf32>
    %cst_14 = arith.constant dense<0.000000e+00> : vector<16xf32>
    %40 = vector.multi_reduction <add>, %39, %cst_14 [1] : vector<16x16xf32> to vector<16xf32>
    %41 = vector.shape_cast %40 : vector<16xf32> to vector<16x1xf32>
    %42 = vector.broadcast %41 : vector<16x1xf32> to vector<16x16xf32>
    %43 = arith.divf %39, %42 : vector<16x16xf32>
    %cst_15 = arith.constant dense<0.000000e+00> : vector<16x16xf32>
    %44 = tpu.matmul %43, %28, %cst_15 {dimension_numbers = #tpu.dot_dimension_numbers<[1], [0], [0], [1], [0, 0, 1, 1], [], []>} : vector<16x16xf32>, vector<16x16xf32>, vector<16x16xf32> -> vector<16x16xf32>
    %45 = vector.extract_strided_slice %6 {offsets = [0, 0], sizes = [16, 32], strides = [1, 1]} : vector<32x32xf32> to vector<16x32xf32>
    %cst_16 = arith.constant dense<0.000000e+00> : vector<16x32xf32>
    %46 = tpu.matmul %44, %45, %cst_16 {dimension_numbers = #tpu.dot_dimension_numbers<[1], [0], [0], [1], [0, 0, 1, 1], [], []>} : vector<16x16xf32>, vector<16x32xf32>, vector<16x32xf32> -> vector<16x32xf32>
    %47 = arith.addf %25, %46 : vector<16x32xf32>
    %48 = vector.extract_strided_slice %24 {offsets = [0, 16], sizes = [16, 16], strides = [1, 1]} : vector<16x96xf32> to vector<16x16xf32>
    %49 = vector.extract_strided_slice %24 {offsets = [0, 48], sizes = [16, 16], strides = [1, 1]} : vector<16x96xf32> to vector<16x16xf32>
    %50 = vector.extract_strided_slice %24 {offsets = [0, 80], sizes = [16, 16], strides = [1, 1]} : vector<16x96xf32> to vector<16x16xf32>
    %cst_17 = arith.constant dense<0.000000e+00> : vector<16x16xf32>
    %51 = tpu.matmul %48, %49, %cst_17 {dimension_numbers = #tpu.dot_dimension_numbers<[1], [1], [0], [0], [0, 0, 1, 0], [], []>} : vector<16x16xf32>, vector<16x16xf32>, vector<16x16xf32> -> vector<16x16xf32>
    %cst_18 = arith.constant 2.500000e-01 : f32
    %52 = vector.broadcast %cst_18 : f32 to vector<16x16xf32>
    %53 = arith.mulf %51, %52 : vector<16x16xf32>
    %54 = arith.addf %53, %1 : vector<16x16xf32>
    %cst_19 = arith.constant dense<0xFF800000> : vector<16xf32>
    %55 = vector.multi_reduction <maximumf>, %54, %cst_19 [1] : vector<16x16xf32> to vector<16xf32>
    %cst_20 = arith.constant 0xFF800000 : f32
    %56 = vector.broadcast %cst_20 : f32 to vector<16xf32>
    %57 = arith.maximumf %56, %55 : vector<16xf32>
    %58 = vector.shape_cast %57 : vector<16xf32> to vector<16x1xf32>
    %59 = vector.broadcast %58 : vector<16x1xf32> to vector<16x16xf32>
    %60 = arith.subf %54, %59 : vector<16x16xf32>
    %61 = math.exp %60 : vector<16x16xf32>
    %cst_21 = arith.constant dense<0.000000e+00> : vector<16xf32>
    %62 = vector.multi_reduction <add>, %61, %cst_21 [1] : vector<16x16xf32> to vector<16xf32>
    %63 = vector.shape_cast %62 : vector<16xf32> to vector<16x1xf32>
    %64 = vector.broadcast %63 : vector<16x1xf32> to vector<16x16xf32>
    %65 = arith.divf %61, %64 : vector<16x16xf32>
    %cst_22 = arith.constant dense<0.000000e+00> : vector<16x16xf32>
    %66 = tpu.matmul %65, %50, %cst_22 {dimension_numbers = #tpu.dot_dimension_numbers<[1], [0], [0], [1], [0, 0, 1, 1], [], []>} : vector<16x16xf32>, vector<16x16xf32>, vector<16x16xf32> -> vector<16x16xf32>
    %67 = vector.extract_strided_slice %6 {offsets = [16, 0], sizes = [16, 32], strides = [1, 1]} : vector<32x32xf32> to vector<16x32xf32>
    %cst_23 = arith.constant dense<0.000000e+00> : vector<16x32xf32>
    %68 = tpu.matmul %66, %67, %cst_23 {dimension_numbers = #tpu.dot_dimension_numbers<[1], [0], [0], [1], [0, 0, 1, 1], [], []>} : vector<16x16xf32>, vector<16x32xf32>, vector<16x32xf32> -> vector<16x32xf32>
    %69 = arith.addf %47, %68 : vector<16x32xf32>
    %70 = vector.broadcast %14 : vector<1x32xf32> to vector<16x32xf32>
    %71 = arith.addf %69, %70 : vector<16x32xf32>
    %72 = arith.addf %0, %71 : vector<16x32xf32>
    %cst_24 = arith.constant dense<0.000000e+00> : vector<16xf32>
    %73 = vector.multi_reduction <add>, %72, %cst_24 [1] : vector<16x32xf32> to vector<16xf32>
    %74 = vector.shape_cast %73 : vector<16xf32> to vector<16x1xf32>
    %cst_25 = arith.constant 3.200000e+01 : f32
    %75 = vector.broadcast %cst_25 : f32 to vector<16x1xf32>
    %76 = arith.divf %74, %75 : vector<16x1xf32>
    %77 = vector.broadcast %76 : vector<16x1xf32> to vector<16x32xf32>
    %78 = arith.subf %72, %77 : vector<16x32xf32>
    %79 = arith.mulf %78, %78 : vector<16x32xf32>
    %cst_26 = arith.constant dense<0.000000e+00> : vector<16xf32>
    %80 = vector.multi_reduction <add>, %79, %cst_26 [1] : vector<16x32xf32> to vector<16xf32>
    %81 = vector.shape_cast %80 : vector<16xf32> to vector<16x1xf32>
    %cst_27 = arith.constant 3.200000e+01 : f32
    %82 = vector.broadcast %cst_27 : f32 to vector<16x1xf32>
    %83 = arith.divf %81, %82 : vector<16x1xf32>
    %84 = vector.broadcast %76 : vector<16x1xf32> to vector<16x32xf32>
    %85 = arith.subf %72, %84 : vector<16x32xf32>
    %cst_28 = arith.constant 9.99999996E-13 : f32
    %86 = vector.broadcast %cst_28 : f32 to vector<16x1xf32>
    %87 = arith.addf %83, %86 : vector<16x1xf32>
    %88 = math.rsqrt %87 : vector<16x1xf32>
    %89 = vector.broadcast %88 : vector<16x1xf32> to vector<16x32xf32>
    %90 = arith.mulf %85, %89 : vector<16x32xf32>
    %91 = vector.broadcast %15 : vector<1x32xf32> to vector<16x32xf32>
    %92 = arith.mulf %90, %91 : vector<16x32xf32>
    %93 = vector.broadcast %16 : vector<1x32xf32> to vector<16x32xf32>
    %94 = arith.addf %92, %93 : vector<16x32xf32>
    %cst_29 = arith.constant dense<0.000000e+00> : vector<16x64xf32>
    %95 = tpu.matmul %94, %7, %cst_29 {dimension_numbers = #tpu.dot_dimension_numbers<[1], [0], [0], [1], [0, 0, 1, 1], [], []>} : vector<16x32xf32>, vector<32x64xf32>, vector<16x64xf32> -> vector<16x64xf32>
    %96 = vector.broadcast %17 : vector<1x64xf32> to vector<16x64xf32>
    %97 = arith.addf %95, %96 : vector<16x64xf32>
    %98 = arith.mulf %97, %97 : vector<16x64xf32>
    %99 = arith.mulf %97, %98 : vector<16x64xf32>
    %cst_30 = arith.constant 4.471500e-02 : f32
    %100 = vector.broadcast %cst_30 : f32 to vector<16x64xf32>
    %101 = arith.mulf %100, %99 : vector<16x64xf32>
    %102 = arith.addf %97, %101 : vector<16x64xf32>
    %cst_31 = arith.constant 0.797884583 : f32
    %103 = vector.broadcast %cst_31 : f32 to vector<16x64xf32>
    %104 = arith.mulf %103, %102 : vector<16x64xf32>
    %105 = math.tanh %104 : vector<16x64xf32>
    %cst_32 = arith.constant 1.000000e+00 : f32
    %106 = vector.broadcast %cst_32 : f32 to vector<16x64xf32>
    %107 = arith.addf %106, %105 : vector<16x64xf32>
    %cst_33 = arith.constant 5.000000e-01 : f32
    %108 = vector.broadcast %cst_33 : f32 to vector<16x64xf32>
    %109 = arith.mulf %108, %107 : vector<16x64xf32>
    %110 = arith.mulf %97, %109 : vector<16x64xf32>
    %cst_34 = arith.constant dense<0.000000e+00> : vector<16x32xf32>
    %111 = tpu.matmul %110, %11, %cst_34 {dimension_numbers = #tpu.dot_dimension_numbers<[1], [0], [0], [1], [0, 0, 1, 1], [], []>} : vector<16x64xf32>, vector<64x32xf32>, vector<16x32xf32> -> vector<16x32xf32>
    %112 = vector.broadcast %18 : vector<1x32xf32> to vector<16x32xf32>
    %113 = arith.addf %111, %112 : vector<16x32xf32>
    %114 = arith.addf %94, %113 : vector<16x32xf32>
    %cst_35 = arith.constant dense<0.000000e+00> : vector<16xf32>
    %115 = vector.multi_reduction <add>, %114, %cst_35 [1] : vector<16x32xf32> to vector<16xf32>
    %116 = vector.shape_cast %115 : vector<16xf32> to vector<16x1xf32>
    %cst_36 = arith.constant 3.200000e+01 : f32
    %117 = vector.broadcast %cst_36 : f32 to vector<16x1xf32>
    %118 = arith.divf %116, %117 : vector<16x1xf32>
    %119 = vector.broadcast %118 : vector<16x1xf32> to vector<16x32xf32>
    %120 = arith.subf %114, %119 : vector<16x32xf32>
    %121 = arith.mulf %120, %120 : vector<16x32xf32>
    %cst_37 = arith.constant dense<0.000000e+00> : vector<16xf32>
    %122 = vector.multi_reduction <add>, %121, %cst_37 [1] : vector<16x32xf32> to vector<16xf32>
    %123 = vector.shape_cast %122 : vector<16xf32> to vector<16x1xf32>
    %cst_38 = arith.constant 3.200000e+01 : f32
    %124 = vector.broadcast %cst_38 : f32 to vector<16x1xf32>
    %125 = arith.divf %123, %124 : vector<16x1xf32>
    %126 = vector.broadcast %118 : vector<16x1xf32> to vector<16x32xf32>
    %127 = arith.subf %114, %126 : vector<16x32xf32>
    %cst_39 = arith.constant 9.99999996E-13 : f32
    %128 = vector.broadcast %cst_39 : f32 to vector<16x1xf32>
    %129 = arith.addf %125, %128 : vector<16x1xf32>
    %130 = math.rsqrt %129 : vector<16x1xf32>
    %131 = vector.broadcast %130 : vector<16x1xf32> to vector<16x32xf32>
    %132 = arith.mulf %127, %131 : vector<16x32xf32>
    %133 = vector.broadcast %19 : vector<1x32xf32> to vector<16x32xf32>
    %134 = arith.mulf %132, %133 : vector<16x32xf32>
    %135 = vector.broadcast %20 : vector<1x32xf32> to vector<16x32xf32>
    %136 = arith.addf %134, %135 : vector<16x32xf32>
    %137 = vector.shape_cast %136 : vector<16x32xf32> to vector<2x8x32xf32>
    %138 = vector.extract_strided_slice %137 {offsets = [0, 7, 0], sizes = [2, 1, 32], strides = [1, 1, 1]} : vector<2x8x32xf32> to vector<2x1x32xf32>
    %139 = vector.extract_strided_slice %137 {offsets = [0, 6, 0], sizes = [2, 1, 32], strides = [1, 1, 1]} : vector<2x8x32xf32> to vector<2x1x32xf32>
    %140 = vector.extract_strided_slice %137 {offsets = [0, 5, 0], sizes = [2, 1, 32], strides = [1, 1, 1]} : vector<2x8x32xf32> to vector<2x1x32xf32>
    %141 = vector.extract_strided_slice %137 {offsets = [0, 4, 0], sizes = [2, 1, 32], strides = [1, 1, 1]} : vector<2x8x32xf32> to vector<2x1x32xf32>
    %142 = vector.extract_strided_slice %137 {offsets = [0, 3, 0], sizes = [2, 1, 32], strides = [1, 1, 1]} : vector<2x8x32xf32> to vector<2x1x32xf32>
    %143 = vector.extract_strided_slice %137 {offsets = [0, 2, 0], sizes = [2, 1, 32], strides = [1, 1, 1]} : vector<2x8x32xf32> to vector<2x1x32xf32>
    %144 = vector.extract_strided_slice %137 {offsets = [0, 1, 0], sizes = [2, 1, 32], strides = [1, 1, 1]} : vector<2x8x32xf32> to vector<2x1x32xf32>
    %145 = vector.extract_strided_slice %137 {offsets = [0, 0, 0], sizes = [2, 1, 32], strides = [1, 1, 1]} : vector<2x8x32xf32> to vector<2x1x32xf32>
    %146 = tpu.concatenate %138, %139, %140, %141, %142, %143, %144, %145 in 1 : vector<2x1x32xf32>, vector<2x1x32xf32>, vector<2x1x32xf32>, vector<2x1x32xf32>, vector<2x1x32xf32>, vector<2x1x32xf32>, vector<2x1x32xf32>, vector<2x1x32xf32> -> vector<2x8x32xf32>
    %147 = vector.shape_cast %146 : vector<2x8x32xf32> to vector<16x32xf32>
    %148 = tpu.concatenate %136, %147 in 1 : vector<16x32xf32>, vector<16x32xf32> -> vector<16x64xf32>
    %cst_40 = arith.constant dense<0.000000e+00> : vector<16x256xf32>
    %149 = tpu.matmul %148, %8, %cst_40 {dimension_numbers = #tpu.dot_dimension_numbers<[1], [0], [0], [1], [0, 0, 1, 1], [], []>} : vector<16x64xf32>, vector<64x256xf32>, vector<16x256xf32> -> vector<16x256xf32>
    %150 = vector.broadcast %12 : vector<1x256xf32> to vector<16x256xf32>
    %151 = arith.addf %149, %150 : vector<16x256xf32>
    %152 = vector.shape_cast %151 : vector<16x256xf32> to vector<2x8x256xf32>
    %cst_41 = arith.constant 0.000000e+00 : f32
    %153 = vector.broadcast %cst_41 : f32 to vector<2x64xf32>
    %cst_42 = arith.constant 0.000000e+00 : f32
    %154 = vector.broadcast %cst_42 : f32 to vector<2x64xf32>
    %cst_43 = arith.constant dense<0.000000e+00> : vector<2x256xf32>
    %155 = tpu.matmul %153, %9, %cst_43 {dimension_numbers = #tpu.dot_dimension_numbers<[1], [0], [0], [1], [0, 0, 1, 1], [], []>} : vector<2x64xf32>, vector<64x256xf32>, vector<2x256xf32> -> vector<2x256xf32>
    %156 = vector.extract_strided_slice %152 {offsets = [0, 0, 0], sizes = [2, 1, 256], strides = [1, 1, 1]} : vector<2x8x256xf32> to vector<2x1x256xf32>
    %157 = vector.shape_cast %156 : vector<2x1x256xf32> to vector<2x256xf32>
    %158 = arith.addf %155, %157 : vector<2x256xf32>
    %159 = vector.extract_strided_slice %158 {offsets = [0, 0], sizes = [2, 64], strides = [1, 1]} : vector<2x256xf32> to vector<2x64xf32>
    %160 = arith.negf %159 : vector<2x64xf32>
    %161 = math.exp %160 : vector<2x64xf32>
    %cst_44 = arith.constant 1.000000e+00 : f32
    %162 = vector.broadcast %cst_44 : f32 to vector<2x64xf32>
    %163 = arith.addf %162, %161 : vector<2x64xf32>
    %164 = arith.divf %162, %163 : vector<2x64xf32>
    %165 = vector.extract_strided_slice %158 {offsets = [0, 64], sizes = [2, 64], strides = [1, 1]} : vector<2x256xf32> to vector<2x64xf32>
    %166 = arith.negf %165 : vector<2x64xf32>
    %167 = math.exp %166 : vector<2x64xf32>
    %cst_45 = arith.constant 1.000000e+00 : f32
    %168 = vector.broadcast %cst_45 : f32 to vector<2x64xf32>
    %169 = arith.addf %168, %167 : vector<2x64xf32>
    %170 = arith.divf %168, %169 : vector<2x64xf32>
    %171 = vector.extract_strided_slice %158 {offsets = [0, 128], sizes = [2, 64], strides = [1, 1]} : vector<2x256xf32> to vector<2x64xf32>
    %172 = math.tanh %171 : vector<2x64xf32>
    %173 = vector.extract_strided_slice %158 {offsets = [0, 192], sizes = [2, 64], strides = [1, 1]} : vector<2x256xf32> to vector<2x64xf32>
    %174 = arith.negf %173 : vector<2x64xf32>
    %175 = math.exp %174 : vector<2x64xf32>
    %cst_46 = arith.constant 1.000000e+00 : f32
    %176 = vector.broadcast %cst_46 : f32 to vector<2x64xf32>
    %177 = arith.addf %176, %175 : vector<2x64xf32>
    %178 = arith.divf %176, %177 : vector<2x64xf32>
    %179 = arith.mulf %170, %154 : vector<2x64xf32>
    %180 = arith.mulf %164, %172 : vector<2x64xf32>
    %181 = arith.addf %179, %180 : vector<2x64xf32>
    %182 = math.tanh %181 : vector<2x64xf32>
    %183 = arith.mulf %178, %182 : vector<2x64xf32>
    %184 = vector.extract_strided_slice %183 {offsets = [0, 0], sizes = [2, 32], strides = [1, 1]} : vector<2x64xf32> to vector<2x32xf32>
    %cst_47 = arith.constant dense<0.000000e+00> : vector<2x256xf32>
    %185 = tpu.matmul %183, %9, %cst_47 {dimension_numbers = #tpu.dot_dimension_numbers<[1], [0], [0], [1], [0, 0, 1, 1], [], []>} : vector<2x64xf32>, vector<64x256xf32>, vector<2x256xf32> -> vector<2x256xf32>
    %186 = vector.extract_strided_slice %152 {offsets = [0, 1, 0], sizes = [2, 1, 256], strides = [1, 1, 1]} : vector<2x8x256xf32> to vector<2x1x256xf32>
    %187 = vector.shape_cast %186 : vector<2x1x256xf32> to vector<2x256xf32>
    %188 = arith.addf %185, %187 : vector<2x256xf32>
    %189 = vector.extract_strided_slice %188 {offsets = [0, 0], sizes = [2, 64], strides = [1, 1]} : vector<2x256xf32> to vector<2x64xf32>
    %190 = arith.negf %189 : vector<2x64xf32>
    %191 = math.exp %190 : vector<2x64xf32>
    %cst_48 = arith.constant 1.000000e+00 : f32
    %192 = vector.broadcast %cst_48 : f32 to vector<2x64xf32>
    %193 = arith.addf %192, %191 : vector<2x64xf32>
    %194 = arith.divf %192, %193 : vector<2x64xf32>
    %195 = vector.extract_strided_slice %188 {offsets = [0, 64], sizes = [2, 64], strides = [1, 1]} : vector<2x256xf32> to vector<2x64xf32>
    %196 = arith.negf %195 : vector<2x64xf32>
    %197 = math.exp %196 : vector<2x64xf32>
    %cst_49 = arith.constant 1.000000e+00 : f32
    %198 = vector.broadcast %cst_49 : f32 to vector<2x64xf32>
    %199 = arith.addf %198, %197 : vector<2x64xf32>
    %200 = arith.divf %198, %199 : vector<2x64xf32>
    %201 = vector.extract_strided_slice %188 {offsets = [0, 128], sizes = [2, 64], strides = [1, 1]} : vector<2x256xf32> to vector<2x64xf32>
    %202 = math.tanh %201 : vector<2x64xf32>
    %203 = vector.extract_strided_slice %188 {offsets = [0, 192], sizes = [2, 64], strides = [1, 1]} : vector<2x256xf32> to vector<2x64xf32>
    %204 = arith.negf %203 : vector<2x64xf32>
    %205 = math.exp %204 : vector<2x64xf32>
    %cst_50 = arith.constant 1.000000e+00 : f32
    %206 = vector.broadcast %cst_50 : f32 to vector<2x64xf32>
    %207 = arith.addf %206, %205 : vector<2x64xf32>
    %208 = arith.divf %206, %207 : vector<2x64xf32>
    %209 = arith.mulf %200, %181 : vector<2x64xf32>
    %210 = arith.mulf %194, %202 : vector<2x64xf32>
    %211 = arith.addf %209, %210 : vector<2x64xf32>
    %212 = math.tanh %211 : vector<2x64xf32>
    %213 = arith.mulf %208, %212 : vector<2x64xf32>
    %cst_51 = arith.constant dense<0.000000e+00> : vector<2x256xf32>
    %214 = tpu.matmul %213, %9, %cst_51 {dimension_numbers = #tpu.dot_dimension_numbers<[1], [0], [0], [1], [0, 0, 1, 1], [], []>} : vector<2x64xf32>, vector<64x256xf32>, vector<2x256xf32> -> vector<2x256xf32>
    %215 = vector.extract_strided_slice %152 {offsets = [0, 2, 0], sizes = [2, 1, 256], strides = [1, 1, 1]} : vector<2x8x256xf32> to vector<2x1x256xf32>
    %216 = vector.shape_cast %215 : vector<2x1x256xf32> to vector<2x256xf32>
    %217 = arith.addf %214, %216 : vector<2x256xf32>
    %218 = vector.extract_strided_slice %217 {offsets = [0, 0], sizes = [2, 64], strides = [1, 1]} : vector<2x256xf32> to vector<2x64xf32>
    %219 = arith.negf %218 : vector<2x64xf32>
    %220 = math.exp %219 : vector<2x64xf32>
    %cst_52 = arith.constant 1.000000e+00 : f32
    %221 = vector.broadcast %cst_52 : f32 to vector<2x64xf32>
    %222 = arith.addf %221, %220 : vector<2x64xf32>
    %223 = arith.divf %221, %222 : vector<2x64xf32>
    %224 = vector.extract_strided_slice %217 {offsets = [0, 64], sizes = [2, 64], strides = [1, 1]} : vector<2x256xf32> to vector<2x64xf32>
    %225 = arith.negf %224 : vector<2x64xf32>
    %226 = math.exp %225 : vector<2x64xf32>
    %cst_53 = arith.constant 1.000000e+00 : f32
    %227 = vector.broadcast %cst_53 : f32 to vector<2x64xf32>
    %228 = arith.addf %227, %226 : vector<2x64xf32>
    %229 = arith.divf %227, %228 : vector<2x64xf32>
    %230 = vector.extract_strided_slice %217 {offsets = [0, 128], sizes = [2, 64], strides = [1, 1]} : vector<2x256xf32> to vector<2x64xf32>
    %231 = math.tanh %230 : vector<2x64xf32>
    %232 = vector.extract_strided_slice %217 {offsets = [0, 192], sizes = [2, 64], strides = [1, 1]} : vector<2x256xf32> to vector<2x64xf32>
    %233 = arith.negf %232 : vector<2x64xf32>
    %234 = math.exp %233 : vector<2x64xf32>
    %cst_54 = arith.constant 1.000000e+00 : f32
    %235 = vector.broadcast %cst_54 : f32 to vector<2x64xf32>
    %236 = arith.addf %235, %234 : vector<2x64xf32>
    %237 = arith.divf %235, %236 : vector<2x64xf32>
    %238 = arith.mulf %229, %211 : vector<2x64xf32>
    %239 = arith.mulf %223, %231 : vector<2x64xf32>
    %240 = arith.addf %238, %239 : vector<2x64xf32>
    %241 = math.tanh %240 : vector<2x64xf32>
    %242 = arith.mulf %237, %241 : vector<2x64xf32>
    %cst_55 = arith.constant dense<0.000000e+00> : vector<2x256xf32>
    %243 = tpu.matmul %242, %9, %cst_55 {dimension_numbers = #tpu.dot_dimension_numbers<[1], [0], [0], [1], [0, 0, 1, 1], [], []>} : vector<2x64xf32>, vector<64x256xf32>, vector<2x256xf32> -> vector<2x256xf32>
    %244 = vector.extract_strided_slice %152 {offsets = [0, 3, 0], sizes = [2, 1, 256], strides = [1, 1, 1]} : vector<2x8x256xf32> to vector<2x1x256xf32>
    %245 = vector.shape_cast %244 : vector<2x1x256xf32> to vector<2x256xf32>
    %246 = arith.addf %243, %245 : vector<2x256xf32>
    %247 = vector.extract_strided_slice %246 {offsets = [0, 0], sizes = [2, 64], strides = [1, 1]} : vector<2x256xf32> to vector<2x64xf32>
    %248 = arith.negf %247 : vector<2x64xf32>
    %249 = math.exp %248 : vector<2x64xf32>
    %cst_56 = arith.constant 1.000000e+00 : f32
    %250 = vector.broadcast %cst_56 : f32 to vector<2x64xf32>
    %251 = arith.addf %250, %249 : vector<2x64xf32>
    %252 = arith.divf %250, %251 : vector<2x64xf32>
    %253 = vector.extract_strided_slice %246 {offsets = [0, 64], sizes = [2, 64], strides = [1, 1]} : vector<2x256xf32> to vector<2x64xf32>
    %254 = arith.negf %253 : vector<2x64xf32>
    %255 = math.exp %254 : vector<2x64xf32>
    %cst_57 = arith.constant 1.000000e+00 : f32
    %256 = vector.broadcast %cst_57 : f32 to vector<2x64xf32>
    %257 = arith.addf %256, %255 : vector<2x64xf32>
    %258 = arith.divf %256, %257 : vector<2x64xf32>
    %259 = vector.extract_strided_slice %246 {offsets = [0, 128], sizes = [2, 64], strides = [1, 1]} : vector<2x256xf32> to vector<2x64xf32>
    %260 = math.tanh %259 : vector<2x64xf32>
    %261 = vector.extract_strided_slice %246 {offsets = [0, 192], sizes = [2, 64], strides = [1, 1]} : vector<2x256xf32> to vector<2x64xf32>
    %262 = arith.negf %261 : vector<2x64xf32>
    %263 = math.exp %262 : vector<2x64xf32>
    %cst_58 = arith.constant 1.000000e+00 : f32
    %264 = vector.broadcast %cst_58 : f32 to vector<2x64xf32>
    %265 = arith.addf %264, %263 : vector<2x64xf32>
    %266 = arith.divf %264, %265 : vector<2x64xf32>
    %267 = arith.mulf %258, %240 : vector<2x64xf32>
    %268 = arith.mulf %252, %260 : vector<2x64xf32>
    %269 = arith.addf %267, %268 : vector<2x64xf32>
    %270 = math.tanh %269 : vector<2x64xf32>
    %271 = arith.mulf %266, %270 : vector<2x64xf32>
    %cst_59 = arith.constant dense<0.000000e+00> : vector<2x256xf32>
    %272 = tpu.matmul %271, %9, %cst_59 {dimension_numbers = #tpu.dot_dimension_numbers<[1], [0], [0], [1], [0, 0, 1, 1], [], []>} : vector<2x64xf32>, vector<64x256xf32>, vector<2x256xf32> -> vector<2x256xf32>
    %273 = vector.extract_strided_slice %152 {offsets = [0, 4, 0], sizes = [2, 1, 256], strides = [1, 1, 1]} : vector<2x8x256xf32> to vector<2x1x256xf32>
    %274 = vector.shape_cast %273 : vector<2x1x256xf32> to vector<2x256xf32>
    %275 = arith.addf %272, %274 : vector<2x256xf32>
    %276 = vector.extract_strided_slice %275 {offsets = [0, 0], sizes = [2, 64], strides = [1, 1]} : vector<2x256xf32> to vector<2x64xf32>
    %277 = arith.negf %276 : vector<2x64xf32>
    %278 = math.exp %277 : vector<2x64xf32>
    %cst_60 = arith.constant 1.000000e+00 : f32
    %279 = vector.broadcast %cst_60 : f32 to vector<2x64xf32>
    %280 = arith.addf %279, %278 : vector<2x64xf32>
    %281 = arith.divf %279, %280 : vector<2x64xf32>
    %282 = vector.extract_strided_slice %275 {offsets = [0, 64], sizes = [2, 64], strides = [1, 1]} : vector<2x256xf32> to vector<2x64xf32>
    %283 = arith.negf %282 : vector<2x64xf32>
    %284 = math.exp %283 : vector<2x64xf32>
    %cst_61 = arith.constant 1.000000e+00 : f32
    %285 = vector.broadcast %cst_61 : f32 to vector<2x64xf32>
    %286 = arith.addf %285, %284 : vector<2x64xf32>
    %287 = arith.divf %285, %286 : vector<2x64xf32>
    %288 = vector.extract_strided_slice %275 {offsets = [0, 128], sizes = [2, 64], strides = [1, 1]} : vector<2x256xf32> to vector<2x64xf32>
    %289 = math.tanh %288 : vector<2x64xf32>
    %290 = vector.extract_strided_slice %275 {offsets = [0, 192], sizes = [2, 64], strides = [1, 1]} : vector<2x256xf32> to vector<2x64xf32>
    %291 = arith.negf %290 : vector<2x64xf32>
    %292 = math.exp %291 : vector<2x64xf32>
    %cst_62 = arith.constant 1.000000e+00 : f32
    %293 = vector.broadcast %cst_62 : f32 to vector<2x64xf32>
    %294 = arith.addf %293, %292 : vector<2x64xf32>
    %295 = arith.divf %293, %294 : vector<2x64xf32>
    %296 = arith.mulf %287, %269 : vector<2x64xf32>
    %297 = arith.mulf %281, %289 : vector<2x64xf32>
    %298 = arith.addf %296, %297 : vector<2x64xf32>
    %299 = math.tanh %298 : vector<2x64xf32>
    %300 = arith.mulf %295, %299 : vector<2x64xf32>
    %cst_63 = arith.constant dense<0.000000e+00> : vector<2x256xf32>
    %301 = tpu.matmul %300, %9, %cst_63 {dimension_numbers = #tpu.dot_dimension_numbers<[1], [0], [0], [1], [0, 0, 1, 1], [], []>} : vector<2x64xf32>, vector<64x256xf32>, vector<2x256xf32> -> vector<2x256xf32>
    %302 = vector.extract_strided_slice %152 {offsets = [0, 5, 0], sizes = [2, 1, 256], strides = [1, 1, 1]} : vector<2x8x256xf32> to vector<2x1x256xf32>
    %303 = vector.shape_cast %302 : vector<2x1x256xf32> to vector<2x256xf32>
    %304 = arith.addf %301, %303 : vector<2x256xf32>
    %305 = vector.extract_strided_slice %304 {offsets = [0, 0], sizes = [2, 64], strides = [1, 1]} : vector<2x256xf32> to vector<2x64xf32>
    %306 = arith.negf %305 : vector<2x64xf32>
    %307 = math.exp %306 : vector<2x64xf32>
    %cst_64 = arith.constant 1.000000e+00 : f32
    %308 = vector.broadcast %cst_64 : f32 to vector<2x64xf32>
    %309 = arith.addf %308, %307 : vector<2x64xf32>
    %310 = arith.divf %308, %309 : vector<2x64xf32>
    %311 = vector.extract_strided_slice %304 {offsets = [0, 64], sizes = [2, 64], strides = [1, 1]} : vector<2x256xf32> to vector<2x64xf32>
    %312 = arith.negf %311 : vector<2x64xf32>
    %313 = math.exp %312 : vector<2x64xf32>
    %cst_65 = arith.constant 1.000000e+00 : f32
    %314 = vector.broadcast %cst_65 : f32 to vector<2x64xf32>
    %315 = arith.addf %314, %313 : vector<2x64xf32>
    %316 = arith.divf %314, %315 : vector<2x64xf32>
    %317 = vector.extract_strided_slice %304 {offsets = [0, 128], sizes = [2, 64], strides = [1, 1]} : vector<2x256xf32> to vector<2x64xf32>
    %318 = math.tanh %317 : vector<2x64xf32>
    %319 = vector.extract_strided_slice %304 {offsets = [0, 192], sizes = [2, 64], strides = [1, 1]} : vector<2x256xf32> to vector<2x64xf32>
    %320 = arith.negf %319 : vector<2x64xf32>
    %321 = math.exp %320 : vector<2x64xf32>
    %cst_66 = arith.constant 1.000000e+00 : f32
    %322 = vector.broadcast %cst_66 : f32 to vector<2x64xf32>
    %323 = arith.addf %322, %321 : vector<2x64xf32>
    %324 = arith.divf %322, %323 : vector<2x64xf32>
    %325 = arith.mulf %316, %298 : vector<2x64xf32>
    %326 = arith.mulf %310, %318 : vector<2x64xf32>
    %327 = arith.addf %325, %326 : vector<2x64xf32>
    %328 = math.tanh %327 : vector<2x64xf32>
    %329 = arith.mulf %324, %328 : vector<2x64xf32>
    %cst_67 = arith.constant dense<0.000000e+00> : vector<2x256xf32>
    %330 = tpu.matmul %329, %9, %cst_67 {dimension_numbers = #tpu.dot_dimension_numbers<[1], [0], [0], [1], [0, 0, 1, 1], [], []>} : vector<2x64xf32>, vector<64x256xf32>, vector<2x256xf32> -> vector<2x256xf32>
    %331 = vector.extract_strided_slice %152 {offsets = [0, 6, 0], sizes = [2, 1, 256], strides = [1, 1, 1]} : vector<2x8x256xf32> to vector<2x1x256xf32>
    %332 = vector.shape_cast %331 : vector<2x1x256xf32> to vector<2x256xf32>
    %333 = arith.addf %330, %332 : vector<2x256xf32>
    %334 = vector.extract_strided_slice %333 {offsets = [0, 0], sizes = [2, 64], strides = [1, 1]} : vector<2x256xf32> to vector<2x64xf32>
    %335 = arith.negf %334 : vector<2x64xf32>
    %336 = math.exp %335 : vector<2x64xf32>
    %cst_68 = arith.constant 1.000000e+00 : f32
    %337 = vector.broadcast %cst_68 : f32 to vector<2x64xf32>
    %338 = arith.addf %337, %336 : vector<2x64xf32>
    %339 = arith.divf %337, %338 : vector<2x64xf32>
    %340 = vector.extract_strided_slice %333 {offsets = [0, 64], sizes = [2, 64], strides = [1, 1]} : vector<2x256xf32> to vector<2x64xf32>
    %341 = arith.negf %340 : vector<2x64xf32>
    %342 = math.exp %341 : vector<2x64xf32>
    %cst_69 = arith.constant 1.000000e+00 : f32
    %343 = vector.broadcast %cst_69 : f32 to vector<2x64xf32>
    %344 = arith.addf %343, %342 : vector<2x64xf32>
    %345 = arith.divf %343, %344 : vector<2x64xf32>
    %346 = vector.extract_strided_slice %333 {offsets = [0, 128], sizes = [2, 64], strides = [1, 1]} : vector<2x256xf32> to vector<2x64xf32>
    %347 = math.tanh %346 : vector<2x64xf32>
    %348 = vector.extract_strided_slice %333 {offsets = [0, 192], sizes = [2, 64], strides = [1, 1]} : vector<2x256xf32> to vector<2x64xf32>
    %349 = arith.negf %348 : vector<2x64xf32>
    %350 = math.exp %349 : vector<2x64xf32>
    %cst_70 = arith.constant 1.000000e+00 : f32
    %351 = vector.broadcast %cst_70 : f32 to vector<2x64xf32>
    %352 = arith.addf %351, %350 : vector<2x64xf32>
    %353 = arith.divf %351, %352 : vector<2x64xf32>
    %354 = arith.mulf %345, %327 : vector<2x64xf32>
    %355 = arith.mulf %339, %347 : vector<2x64xf32>
    %356 = arith.addf %354, %355 : vector<2x64xf32>
    %357 = math.tanh %356 : vector<2x64xf32>
    %358 = arith.mulf %353, %357 : vector<2x64xf32>
    %cst_71 = arith.constant dense<0.000000e+00> : vector<2x256xf32>
    %359 = tpu.matmul %358, %9, %cst_71 {dimension_numbers = #tpu.dot_dimension_numbers<[1], [0], [0], [1], [0, 0, 1, 1], [], []>} : vector<2x64xf32>, vector<64x256xf32>, vector<2x256xf32> -> vector<2x256xf32>
    %360 = vector.extract_strided_slice %152 {offsets = [0, 7, 0], sizes = [2, 1, 256], strides = [1, 1, 1]} : vector<2x8x256xf32> to vector<2x1x256xf32>
    %361 = vector.shape_cast %360 : vector<2x1x256xf32> to vector<2x256xf32>
    %362 = arith.addf %359, %361 : vector<2x256xf32>
    %363 = vector.extract_strided_slice %362 {offsets = [0, 0], sizes = [2, 64], strides = [1, 1]} : vector<2x256xf32> to vector<2x64xf32>
    %364 = arith.negf %363 : vector<2x64xf32>
    %365 = math.exp %364 : vector<2x64xf32>
    %cst_72 = arith.constant 1.000000e+00 : f32
    %366 = vector.broadcast %cst_72 : f32 to vector<2x64xf32>
    %367 = arith.addf %366, %365 : vector<2x64xf32>
    %368 = arith.divf %366, %367 : vector<2x64xf32>
    %369 = vector.extract_strided_slice %362 {offsets = [0, 64], sizes = [2, 64], strides = [1, 1]} : vector<2x256xf32> to vector<2x64xf32>
    %370 = arith.negf %369 : vector<2x64xf32>
    %371 = math.exp %370 : vector<2x64xf32>
    %cst_73 = arith.constant 1.000000e+00 : f32
    %372 = vector.broadcast %cst_73 : f32 to vector<2x64xf32>
    %373 = arith.addf %372, %371 : vector<2x64xf32>
    %374 = arith.divf %372, %373 : vector<2x64xf32>
    %375 = vector.extract_strided_slice %362 {offsets = [0, 128], sizes = [2, 64], strides = [1, 1]} : vector<2x256xf32> to vector<2x64xf32>
    %376 = math.tanh %375 : vector<2x64xf32>
    %377 = vector.extract_strided_slice %362 {offsets = [0, 192], sizes = [2, 64], strides = [1, 1]} : vector<2x256xf32> to vector<2x64xf32>
    %378 = arith.negf %377 : vector<2x64xf32>
    %379 = math.exp %378 : vector<2x64xf32>
    %cst_74 = arith.constant 1.000000e+00 : f32
    %380 = vector.broadcast %cst_74 : f32 to vector<2x64xf32>
    %381 = arith.addf %380, %379 : vector<2x64xf32>
    %382 = arith.divf %380, %381 : vector<2x64xf32>
    %383 = arith.mulf %374, %356 : vector<2x64xf32>
    %384 = arith.mulf %368, %376 : vector<2x64xf32>
    %385 = arith.addf %383, %384 : vector<2x64xf32>
    %386 = math.tanh %385 : vector<2x64xf32>
    %387 = arith.mulf %382, %386 : vector<2x64xf32>
    %388 = vector.extract_strided_slice %387 {offsets = [0, 32], sizes = [2, 32], strides = [1, 1]} : vector<2x64xf32> to vector<2x32xf32>
    %389 = tpu.concatenate %184, %388 in 1 : vector<2x32xf32>, vector<2x32xf32> -> vector<2x64xf32>
    %cst_75 = arith.constant 0.000000e+00 : f32
    %390 = vector.broadcast %cst_75 : f32 to vector<6x64xf32>
    %391 = tpu.concatenate %389, %390 in 0 : vector<2x64xf32>, vector<6x64xf32> -> vector<8x64xf32>
    %cst_76 = arith.constant dense<0.000000e+00> : vector<8x128xf32>
    %392 = tpu.matmul %391, %10, %cst_76 {dimension_numbers = #tpu.dot_dimension_numbers<[1], [0], [0], [1], [0, 0, 1, 1], [], []>} : vector<8x64xf32>, vector<64x128xf32>, vector<8x128xf32> -> vector<8x128xf32>
    %393 = vector.broadcast %21 : vector<1x128xf32> to vector<8x128xf32>
    %394 = arith.addf %392, %393 : vector<8x128xf32>
    %c0_77 = arith.constant 0 : index
    %c0_78 = arith.constant 0 : index
    %395 = vector.load %arg5[%c0_77, %c0_78] : memref<8x128xf32, #tpu.memory_space<vmem>>, vector<8x128xf32>
    tpu.vector_store %arg5[%c0_77, %c0_78], %394 {strides = array<i32>} : memref<8x128xf32, #tpu.memory_space<vmem>>, vector<8x128xf32>,
    return
  }
}

</mosaic_0001>

<llo_original>
// kernel: forward.1
$region0: #{forward.1}
  #allocation0 [shape = 'u32[]', space=smem, size = 0x4, offset = 0x4, fixed_abs, tag = 'smem constant byte address 0x4 - core index']
  #allocation1 [shape = 'u32[144,128]{1,0:T(1,128)}', space=vmem, size = 0x12000, scoped, tag = 'internal scratch']
  %s0 = inlined_call_operand.vmem [shape: f32[16,32], index: 0, kind: input, shape index: {}]
  %s1 = inlined_call_operand.vmem [shape: f32[16,16], index: 1, kind: input, shape index: {}]
  %s2 = inlined_call_operand.vmem [shape: f32[32,192], index: 2, kind: input, shape index: {}]
  %s3 = inlined_call_operand.vmem [shape: f32[72,672], index: 3, kind: input, shape index: {}]
  %s4 = inlined_call_operand.vmem [shape: f32[16,128], index: 4, kind: input, shape index: {}]
  %s5 = inlined_call_operand.vmem [shape: f32[8,128], index: 5, kind: output, shape index: {}]
  %s6 = sld [smem:[#allocation0]]
  $region30: #{forward.1} parent=0
    _
  %s8 = ssub.s32 1, %s6
  %s9 = scalar_select 0, %s8, %s6
  // Predicated region
  $region2: #{forward.1} parent=0 // pred_check
    _
  $region3: #{forward.1} parent=0 // pred_check_branch
    %11 = sbr.rel (0) target = $region5
  $region4: #{forward.1} parent=0 // pred_region
    _
  $region5: #{forward.1} parent=0 // pred_fallthru
    _
  // Predicated region
  $region6: #{forward.1} parent=0 // pred_check
    _
  $region7: #{forward.1} parent=0 // pred_check_branch
    %13 = sbr.rel (0) target = $region9
  $region8: #{forward.1} parent=0 // pred_region
    _
  $region9: #{forward.1} parent=0 // pred_fallthru
    _
  // Predicated region
  $region10: #{forward.1} parent=0 // pred_check
    _
  $region11: #{forward.1} parent=0 // pred_check_branch
    %15 = sbr.rel (0) target = $region13
  $region12: #{forward.1} parent=0 // pred_region
    _
  $region13: #{forward.1} parent=0 // pred_fallthru
    _
  // Predicated region
  $region14: #{forward.1} parent=0 // pred_check
    _
  $region15: #{forward.1} parent=0 // pred_check_branch
    %17 = sbr.rel (0) target = $region17
  $region16: #{forward.1} parent=0 // pred_region
    _
  $region17: #{forward.1} parent=0 // pred_fallthru
    _
  // Predicated region
  $region18: #{forward.1} parent=0 // pred_check
    _
  $region19: #{forward.1} parent=0 // pred_check_branch
    %19 = sbr.rel (0) target = $region21
  $region20: #{forward.1} parent=0 // pred_region
    _
  $region21: #{forward.1} parent=0 // pred_fallthru
    _
  %v20 = vld [vmem:[%s0] sm:$0xff]
  %v21 = vld [vmem:[%s0 + $0x8] sm:$0xff]
  %v22 = vld [vmem:[%s1] sm:$0xff]
  %v23 = vld [vmem:[%s1 + $0x8] sm:$0xff]
  %v24 = vld [vmem:[%s2] sm:$0xff]
  %v25 = vld [vmem:[%s2 + $0x8] sm:$0xff]
  %v26 = vld [vmem:[%s2 + $0x10] sm:$0xff]
  %v27 = vld [vmem:[%s2 + $0x18] sm:$0xff]
  %v28 = vld [vmem:[%s2 + $0x20] sm:$0xff]
  %v29 = vld [vmem:[%s2 + $0x28] sm:$0xff]
  %v30 = vld [vmem:[%s2 + $0x30] sm:$0xff]
  %v31 = vld [vmem:[%s2 + $0x38] sm:$0xff]
  %v32 = vld [vmem:[%s3] sm:$0xff]
  %v33 = vld [vmem:[%s3 + $0x8] sm:$0xff]
  %v34 = vld [vmem:[%s3 + $0x10] sm:$0xff]
  %v35 = vld [vmem:[%s3 + $0x18] sm:$0xff]
  %v36 = vld [vmem:[%s3 + $0x20] sm:$0xff]
  %v37 = vld [vmem:[%s3 + $0x28] sm:$0xff]
  %v38 = vld [vmem:[%s3 + $0x30] sm:$0xff]
  %v39 = vld [vmem:[%s3 + $0x38] sm:$0xff]
  %v40 = vld [vmem:[%s3 + $0x40] sm:$0xff]
  %v41 = vld [vmem:[%s3 + $0x48] sm:$0xff]
  %v42 = vld [vmem:[%s3 + $0x50] sm:$0xff]
  %v43 = vld [vmem:[%s3 + $0x58] sm:$0xff]
  %v44 = vld [vmem:[%s3 + $0x60] sm:$0xff]
  %v45 = vld [vmem:[%s3 + $0x68] sm:$0xff]
  %v46 = vld [vmem:[%s3 + $0x70] sm:$0xff]
  %v47 = vld [vmem:[%s3 + $0x78] sm:$0xff]
  %v48 = vld [vmem:[%s3 + $0x80] sm:$0xff]
  %v49 = vld [vmem:[%s3 + $0x88] sm:$0xff]
  %v50 = vld [vmem:[%s3 + $0x90] sm:$0xff]
  %v51 = vld [vmem:[%s3 + $0x98] sm:$0xff]
  %v52 = vld [vmem:[%s3 + $0xa0] sm:$0xff]
  %v53 = vld [vmem:[%s3 + $0xa8] sm:$0xff]
  %v54 = vld [vmem:[%s3 + $0xb0] sm:$0xff]
  %v55 = vld [vmem:[%s3 + $0xb8] sm:$0xff]
  %v56 = vld [vmem:[%s3 + $0xc0] sm:$0xff]
  %v57 = vld [vmem:[%s3 + $0xc8] sm:$0xff]
  %v58 = vld [vmem:[%s3 + $0xd0] sm:$0xff]
  %v59 = vld [vmem:[%s3 + $0xd8] sm:$0xff]
  %v60 = vld [vmem:[%s3 + $0xe0] sm:$0xff]
  %v61 = vld [vmem:[%s3 + $0xe8] sm:$0xff]
  %v62 = vld [vmem:[%s3 + $0xf0] sm:$0xff]
  %v63 = vld [vmem:[%s3 + $0xf8] sm:$0xff]
  %v64 = vld [vmem:[%s3 + $0x100] sm:$0xff]
  %v65 = vld [vmem:[%s3 + $0x108] sm:$0xff]
  %v66 = vld [vmem:[%s3 + $0x110] sm:$0xff]
  %v67 = vld [vmem:[%s3 + $0x118] sm:$0xff]
  %v68 = vld [vmem:[%s3 + $0x120] sm:$0xff]
  %v69 = vld [vmem:[%s3 + $0x128] sm:$0xff]
  %v70 = vld [vmem:[%s3 + $0x130] sm:$0xff]
  %v71 = vld [vmem:[%s3 + $0x138] sm:$0xff]
  %v72 = vld [vmem:[%s3 + $0x140] sm:$0xff]
  %v73 = vld [vmem:[%s3 + $0x148] sm:$0xff]
  %v74 = vld [vmem:[%s3 + $0x150] sm:$0xff]
  %v75 = vld [vmem:[%s3 + $0x158] sm:$0xff]
  %v76 = vld [vmem:[%s3 + $0x160] sm:$0xff]
  %v77 = vld [vmem:[%s3 + $0x168] sm:$0xff]
  %v78 = vld [vmem:[%s3 + $0x170] sm:$0xff]
  %v79 = vld [vmem:[%s3 + $0x178] sm:$0xff]
  %v80 = vld [vmem:[%s3 + $0x180] sm:$0xff]
  %v81 = vld [vmem:[%s3 + $0x188] sm:$0xff]
  %v82 = vld [vmem:[%s4] sm:$0xff]
  %v83 = vld [vmem:[%s4 + $0x8] sm:$0xff]
  %v84 = vlaneseq
  %v85 = vshrl.u32 %v84, 7
  %v86 = vsub.s32 0, %v85
  %v87 = vrot.slane %v82, %v86
  %vm88 = vcmask 261120
  %v90 = vsel %vm88, %v20, 0
  %v93 = vsel %vm88, %v21, 0
  %95 = vmatprep.subr.mxu0 0.0
  %96 = vmatpush1.msra.mxu0 %v24
  %97 = vmatprep.subr.mxu0 0.0
  %98 = vmatpush1.msra.mxu0 %v26
  %99 = vmatprep.subr.mxu0 0.0
  %100 = vmatpush1.msra.mxu0 %v28
  %101 = vmatprep.subr.mxu0 0.0
  %102 = vmatpush1.msra.mxu0 %v30
  %103 = vmatprep.subr.mxu0 0.0
  %104 = vmatpush1.msra.mxu0 0.0
  %105 = vmatprep.subr.mxu0 0.0
  %106 = vmatpush1.msra.mxu0 0.0
  %107 = vmatprep.subr.mxu0 0.0
  %108 = vmatpush1.msra.mxu0 0.0
  %109 = vmatprep.subr.mxu0 0.0
  %110 = vmatpush1.msra.mxu0 0.0
  %111 = vmatprep.subr.mxu0 0.0
  %112 = vmatpush1.msra.mxu0 0.0
  %113 = vmatprep.subr.mxu0 0.0
  %114 = vmatpush1.msra.mxu0 0.0
  %115 = vmatprep.subr.mxu0 0.0
  %116 = vmatpush1.msra.mxu0 0.0
  %117 = vmatprep.subr.mxu0 0.0
  %118 = vmatpush1.msra.mxu0 0.0
  %119 = vmatprep.subr.mxu0 0.0
  %120 = vmatpush1.msra.mxu0 0.0
  %121 = vmatprep.subr.mxu0 0.0
  %122 = vmatpush1.msra.mxu0 0.0
  %123 = vmatprep.subr.mxu0 0.0
  %124 = vmatpush1.msra.mxu0 0.0
  %125 = vmatprep.subr.mxu0 0.0
  %126 = vmatpush1.msra.mxu0 0.0
  %127 = vmatprep.subr.mxu0 0.0
  %128 = vmatpush1.msra.mxu0 0.0
  %129 = vmatprep.subr.mxu0 0.0
  %130 = vmatpush1.msra.mxu0 0.0
  %131 = vmatprep.subr.mxu0 0.0
  %132 = vmatpush1.msra.mxu0 0.0
  %133 = vmatprep.subr.mxu0 0.0
  %134 = vmatpush1.msra.mxu0 0.0
  %135 = vmatprep.subr.mxu0 0.0
  %136 = vmatpush1.msra.mxu0 0.0
  %137 = vmatprep.subr.mxu0 0.0
  %138 = vmatpush1.msra.mxu0 0.0
  %139 = vmatprep.subr.mxu0 0.0
  %140 = vmatpush1.msra.mxu0 0.0
  %141 = vmatprep.subr.mxu0 0.0
  %142 = vmatpush1.msra.mxu0 0.0
  %143 = vmatprep.subr.mxu0 0.0
  %144 = vmatpush1.msra.mxu0 0.0
  %145 = vmatprep.subr.mxu0 0.0
  %146 = vmatpush1.msra.mxu0 0.0
  %147 = vmatprep.subr.mxu0 0.0
  %148 = vmatpush1.msra.mxu0 0.0
  %149 = vmatprep.subr.mxu0 0.0
  %150 = vmatpush1.msra.mxu0 0.0
  %151 = vmatprep.subr.mxu0 0.0
  %152 = vmatpush1.msra.mxu0 0.0
  %153 = vmatprep.subr.mxu0 0.0
  %154 = vmatpush1.msra.mxu0 0.0
  %155 = vmatprep.subr.mxu0 0.0
  %156 = vmatpush1.msra.mxu0 0.0
  %157 = vmatprep.subr.mxu0 0.0
  %158 = vmatpush1.msra.mxu0 0.0
  %159 = vmatprep.mubr.f32.mxu0 0.0
  %160 = vmatmul.mubr.f32.gmra.mrb[0].mxu0 %v90
  %v161 = vpop.f32.mrb[0].mxu0
  %v162 = vadd.f32 %v87, %v161
  %v163 = vpop.f32.mrb[0].mxu0
  %164 = vmatprep.mubr.f32.mxu0 0.0
  %165 = vmatmul.mubr.f32.gmra.mrb[0].mxu0 %v93
  %v166 = vpop.f32.mrb[0].mxu0
  %v167 = vadd.f32 %v87, %v166
  %v168 = vpop.f32.mrb[0].mxu0
  %169 = vdwg.mxu0
  %172 = vrot.lane.b32.xlu0 %v162, 96
  %v173 = vpop.permute.xlu0 %172
  %174 = vrot.lane.b32.xlu0 %v167, 96
  %v175 = vpop.permute.xlu0 %174
  %vm176 = vcmask 130048
  %v177 = vsel %vm176, %v162, 0
  %v179 = vsel %vm176, %v167, 0
  %v181 = vsel %vm176, %v173, 0
  %v183 = vsel %vm176, %v175, 0
  %185 = vmatprep.subr.mxu0 0.0
  %186 = vmatpush1.xpose.msra.mxu0 %v181
  %187 = vmatprep.subr.mxu0 0.0
  %188 = vmatpush1.xpose.msra.mxu0 %v183
  %189 = vmatprep.subr.mxu0 0.0
  %190 = vmatpush1.xpose.msra.mxu0 0.0
  %191 = vmatprep.subr.mxu0 0.0
  %192 = vmatpush1.xpose.msra.mxu0 0.0
  %193 = vmatprep.subr.mxu0 0.0
  %194 = vmatpush1.xpose.msra.mxu0 0.0
  %195 = vmatprep.subr.mxu0 0.0
  %196 = vmatpush1.xpose.msra.mxu0 0.0
  %197 = vmatprep.subr.mxu0 0.0
  %198 = vmatpush1.xpose.msra.mxu0 0.0
  %199 = vmatprep.subr.mxu0 0.0
  %200 = vmatpush1.xpose.msra.mxu0 0.0
  %201 = vmatprep.subr.mxu0 0.0
  %202 = vmatpush1.xpose.msra.mxu0 0.0
  %203 = vmatprep.subr.mxu0 0.0
  %204 = vmatpush1.xpose.msra.mxu0 0.0
  %205 = vmatprep.subr.mxu0 0.0
  %206 = vmatpush1.xpose.msra.mxu0 0.0
  %207 = vmatprep.subr.mxu0 0.0
  %208 = vmatpush1.xpose.msra.mxu0 0.0
  %209 = vmatprep.subr.mxu0 0.0
  %210 = vmatpush1.xpose.msra.mxu0 0.0
  %211 = vmatprep.subr.mxu0 0.0
  %212 = vmatpush1.xpose.msra.mxu0 0.0
  %213 = vmatprep.subr.mxu0 0.0
  %214 = vmatpush1.xpose.msra.mxu0 0.0
  %215 = vmatprep.subr.mxu0 0.0
  %216 = vmatpush1.xpose.msra.mxu0 0.0
  %217 = vmatprep.subr.mxu0 0.0
  %218 = vmatpush1.xpose.msra.mxu0 0.0
  %219 = vmatprep.subr.mxu0 0.0
  %220 = vmatpush1.xpose.msra.mxu0 0.0
  %221 = vmatprep.subr.mxu0 0.0
  %222 = vmatpush1.xpose.msra.mxu0 0.0
  %223 = vmatprep.subr.mxu0 0.0
  %224 = vmatpush1.xpose.msra.mxu0 0.0
  %225 = vmatprep.subr.mxu0 0.0
  %226 = vmatpush1.xpose.msra.mxu0 0.0
  %227 = vmatprep.subr.mxu0 0.0
  %228 = vmatpush1.xpose.msra.mxu0 0.0
  %229 = vmatprep.subr.mxu0 0.0
  %230 = vmatpush1.xpose.msra.mxu0 0.0
  %231 = vmatprep.subr.mxu0 0.0
  %232 = vmatpush1.xpose.msra.mxu0 0.0
  %233 = vmatprep.subr.mxu0 0.0
  %234 = vmatpush1.xpose.msra.mxu0 0.0
  %235 = vmatprep.subr.mxu0 0.0
  %236 = vmatpush1.xpose.msra.mxu0 0.0
  %237 = vmatprep.subr.mxu0 0.0
  %238 = vmatpush1.xpose.msra.mxu0 0.0
  %239 = vmatprep.subr.mxu0 0.0
  %240 = vmatpush1.xpose.msra.mxu0 0.0
  %241 = vmatprep.subr.mxu0 0.0
  %242 = vmatpush1.xpose.msra.mxu0 0.0
  %243 = vmatprep.subr.mxu0 0.0
  %244 = vmatpush1.xpose.msra.mxu0 0.0
  %245 = vmatprep.subr.mxu0 0.0
  %246 = vmatpush1.xpose.msra.mxu0 0.0
  %247 = vmatprep.subr.mxu0 0.0
  %248 = vmatpush1.xpose.msra.mxu0 0.0
  %249 = vmatprep.mubr.f32.mxu0 0.0
  %250 = vmatmul.mubr.f32.gmra.mrb[0].mxu0 %v177
  %v251 = vpop.f32.mrb[0].mxu0
  %v252 = vadd.f32 0.0, %v251
  %v253 = vpop.f32.mrb[0].mxu0
  %254 = vmatprep.mubr.f32.mxu0 0.0
  %255 = vmatmul.mubr.f32.gmra.mrb[0].mxu0 %v179
  %v256 = vpop.f32.mrb[0].mxu0
  %v257 = vadd.f32 0.0, %v256
  %v258 = vpop.f32.mrb[0].mxu0
  %259 = vdwg.mxu0
  %v260 = vmul.f32 %v252, 0.25
  %v261 = vmul.f32 %v257, 0.25
  %v262 = vadd.f32 %v260, %v22
  %v263 = vadd.f32 %v261, %v23
  %v264 = vsel %vm176, %v262, -inf
  %265 = vmax.xlane.f32.xlu0 %v264
  %v266 = vpop.xlane.xlu0 %265
  %v267 = vsel %vm176, %v263, -inf
  %268 = vmax.xlane.f32.xlu0 %v267
  %v269 = vpop.xlane.xlu0 %268
  %v270 = vsub.f32 %v262, %v266
  %v271 = vsub.f32 %v263, %v269
  %v272 = vmul.f32 %v270, 1.442695
  %v273 = vpow.pop %v272
  %v274 = vmul.f32 %v271, 1.442695
  %v275 = vpow.pop %v274
  %v276 = vsel %vm176, %v273, 0.0
  %277 = vadd.xlane.f32.xlu0 %v276
  %v278 = vpop.xlane.xlu0 %277
  %v279 = vsel %vm176, %v275, 0.0
  %280 = vadd.xlane.f32.xlu0 %v279
  %v281 = vpop.xlane.xlu0 %280
  %v282 = vrcp.pop %v278
  %v283 = vmul.f32 %v273, %v282
  %v284 = vrcp.pop %v281
  %v285 = vmul.f32 %v275, %v284
  %286 = vrot.lane.b32.xlu0 %v162, 64
  %v287 = vpop.permute.xlu0 %286
  %288 = vrot.lane.b32.xlu0 %v167, 64
  %v289 = vpop.permute.xlu0 %288
  %v293 = vsel %vm176, %v283, 0
  %v296 = vsel %vm176, %v285, 0
  %298 = vmatprep.subr.mxu0 0.0
  %299 = vmatpush1.msra.mxu0 %v287
  %300 = vmatprep.subr.mxu0 0.0
  %301 = vmatpush1.msra.mxu0 %v289
  %302 = vmatprep.subr.mxu0 0.0
  %303 = vmatpush1.msra.mxu0 0.0
  %304 = vmatprep.subr.mxu0 0.0
  %305 = vmatpush1.msra.mxu0 0.0
  %306 = vmatprep.subr.mxu0 0.0
  %307 = vmatpush1.msra.mxu0 0.0
  %308 = vmatprep.subr.mxu0 0.0
  %309 = vmatpush1.msra.mxu0 0.0
  %310 = vmatprep.subr.mxu0 0.0
  %311 = vmatpush1.msra.mxu0 0.0
  %312 = vmatprep.subr.mxu0 0.0
  %313 = vmatpush1.msra.mxu0 0.0
  %314 = vmatprep.subr.mxu0 0.0
  %315 = vmatpush1.msra.mxu0 0.0
  %316 = vmatprep.subr.mxu0 0.0
  %317 = vmatpush1.msra.mxu0 0.0
  %318 = vmatprep.subr.mxu0 0.0
  %319 = vmatpush1.msra.mxu0 0.0
  %320 = vmatprep.subr.mxu0 0.0
  %321 = vmatpush1.msra.mxu0 0.0
  %322 = vmatprep.subr.mxu0 0.0
  %323 = vmatpush1.msra.mxu0 0.0
  %324 = vmatprep.subr.mxu0 0.0
  %325 = vmatpush1.msra.mxu0 0.0
  %326 = vmatprep.subr.mxu0 0.0
  %327 = vmatpush1.msra.mxu0 0.0
  %328 = vmatprep.subr.mxu0 0.0
  %329 = vmatpush1.msra.mxu0 0.0
  %330 = vmatprep.subr.mxu0 0.0
  %331 = vmatpush1.msra.mxu0 0.0
  %332 = vmatprep.subr.mxu0 0.0
  %333 = vmatpush1.msra.mxu0 0.0
  %334 = vmatprep.subr.mxu0 0.0
  %335 = vmatpush1.msra.mxu0 0.0
  %336 = vmatprep.subr.mxu0 0.0
  %337 = vmatpush1.msra.mxu0 0.0
  %338 = vmatprep.subr.mxu0 0.0
  %339 = vmatpush1.msra.mxu0 0.0
  %340 = vmatprep.subr.mxu0 0.0
  %341 = vmatpush1.msra.mxu0 0.0
  %342 = vmatprep.subr.mxu0 0.0
  %343 = vmatpush1.msra.mxu0 0.0
  %344 = vmatprep.subr.mxu0 0.0
  %345 = vmatpush1.msra.mxu0 0.0
  %346 = vmatprep.subr.mxu0 0.0
  %347 = vmatpush1.msra.mxu0 0.0
  %348 = vmatprep.subr.mxu0 0.0
  %349 = vmatpush1.msra.mxu0 0.0
  %350 = vmatprep.subr.mxu0 0.0
  %351 = vmatpush1.msra.mxu0 0.0
  %352 = vmatprep.subr.mxu0 0.0
  %353 = vmatpush1.msra.mxu0 0.0
  %354 = vmatprep.subr.mxu0 0.0
  %355 = vmatpush1.msra.mxu0 0.0
  %356 = vmatprep.subr.mxu0 0.0
  %357 = vmatpush1.msra.mxu0 0.0
  %358 = vmatprep.subr.mxu0 0.0
  %359 = vmatpush1.msra.mxu0 0.0
  %360 = vmatprep.subr.mxu0 0.0
  %361 = vmatpush1.msra.mxu0 0.0
  %362 = vmatprep.mubr.f32.mxu0 0.0
  %363 = vmatmul.mubr.f32.gmra.mrb[0].mxu0 %v293
  %v364 = vpop.f32.mrb[0].mxu0
  %v365 = vadd.f32 0.0, %v364
  %v366 = vpop.f32.mrb[0].mxu0
  %367 = vmatprep.mubr.f32.mxu0 0.0
  %368 = vmatmul.mubr.f32.gmra.mrb[0].mxu0 %v296
  %v369 = vpop.f32.mrb[0].mxu0
  %v370 = vadd.f32 0.0, %v369
  %v371 = vpop.f32.mrb[0].mxu0
  %372 = vdwg.mxu0
  %373 = vrot.lane.b32.xlu0 %v162, 112
  %v374 = vpop.permute.xlu0 %373
  %375 = vrot.lane.b32.xlu0 %v167, 112
  %v376 = vpop.permute.xlu0 %375
  %377 = vrot.lane.b32.xlu0 %v162, 80
  %v378 = vpop.permute.xlu0 %377
  %379 = vrot.lane.b32.xlu0 %v167, 80
  %v380 = vpop.permute.xlu0 %379
  %v381 = vsel %vm176, %v374, 0
  %v383 = vsel %vm176, %v376, 0
  %v385 = vsel %vm176, %v378, 0
  %v387 = vsel %vm176, %v380, 0
  %389 = vmatprep.subr.mxu0 0.0
  %390 = vmatpush1.xpose.msra.mxu0 %v385
  %391 = vmatprep.subr.mxu0 0.0
  %392 = vmatpush1.xpose.msra.mxu0 %v387
  %393 = vmatprep.subr.mxu0 0.0
  %394 = vmatpush1.xpose.msra.mxu0 0.0
  %395 = vmatprep.subr.mxu0 0.0
  %396 = vmatpush1.xpose.msra.mxu0 0.0
  %397 = vmatprep.subr.mxu0 0.0
  %398 = vmatpush1.xpose.msra.mxu0 0.0
  %399 = vmatprep.subr.mxu0 0.0
  %400 = vmatpush1.xpose.msra.mxu0 0.0
  %401 = vmatprep.subr.mxu0 0.0
  %402 = vmatpush1.xpose.msra.mxu0 0.0
  %403 = vmatprep.subr.mxu0 0.0
  %404 = vmatpush1.xpose.msra.mxu0 0.0
  %405 = vmatprep.subr.mxu0 0.0
  %406 = vmatpush1.xpose.msra.mxu0 0.0
  %407 = vmatprep.subr.mxu0 0.0
  %408 = vmatpush1.xpose.msra.mxu0 0.0
  %409 = vmatprep.subr.mxu0 0.0
  %410 = vmatpush1.xpose.msra.mxu0 0.0
  %411 = vmatprep.subr.mxu0 0.0
  %412 = vmatpush1.xpose.msra.mxu0 0.0
  %413 = vmatprep.subr.mxu0 0.0
  %414 = vmatpush1.xpose.msra.mxu0 0.0
  %415 = vmatprep.subr.mxu0 0.0
  %416 = vmatpush1.xpose.msra.mxu0 0.0
  %417 = vmatprep.subr.mxu0 0.0
  %418 = vmatpush1.xpose.msra.mxu0 0.0
  %419 = vmatprep.subr.mxu0 0.0
  %420 = vmatpush1.xpose.msra.mxu0 0.0
  %421 = vmatprep.subr.mxu0 0.0
  %422 = vmatpush1.xpose.msra.mxu0 0.0
  %423 = vmatprep.subr.mxu0 0.0
  %424 = vmatpush1.xpose.msra.mxu0 0.0
  %425 = vmatprep.subr.mxu0 0.0
  %426 = vmatpush1.xpose.msra.mxu0 0.0
  %427 = vmatprep.subr.mxu0 0.0
  %428 = vmatpush1.xpose.msra.mxu0 0.0
  %429 = vmatprep.subr.mxu0 0.0
  %430 = vmatpush1.xpose.msra.mxu0 0.0
  %431 = vmatprep.subr.mxu0 0.0
  %432 = vmatpush1.xpose.msra.mxu0 0.0
  %433 = vmatprep.subr.mxu0 0.0
  %434 = vmatpush1.xpose.msra.mxu0 0.0
  %435 = vmatprep.subr.mxu0 0.0
  %436 = vmatpush1.xpose.msra.mxu0 0.0
  %437 = vmatprep.subr.mxu0 0.0
  %438 = vmatpush1.xpose.msra.mxu0 0.0
  %439 = vmatprep.subr.mxu0 0.0
  %440 = vmatpush1.xpose.msra.mxu0 0.0
  %441 = vmatprep.subr.mxu0 0.0
  %442 = vmatpush1.xpose.msra.mxu0 0.0
  %443 = vmatprep.subr.mxu0 0.0
  %444 = vmatpush1.xpose.msra.mxu0 0.0
  %445 = vmatprep.subr.mxu0 0.0
  %446 = vmatpush1.xpose.msra.mxu0 0.0
  %447 = vmatprep.subr.mxu0 0.0
  %448 = vmatpush1.xpose.msra.mxu0 0.0
  %449 = vmatprep.subr.mxu0 0.0
  %450 = vmatpush1.xpose.msra.mxu0 0.0
  %451 = vmatprep.subr.mxu0 0.0
  %452 = vmatpush1.xpose.msra.mxu0 0.0
  %453 = vmatprep.mubr.f32.mxu0 0.0
  %454 = vmatmul.mubr.f32.gmra.mrb[0].mxu0 %v381
  %v455 = vpop.f32.mrb[0].mxu0
  %v456 = vadd.f32 0.0, %v455
  %v457 = vpop.f32.mrb[0].mxu0
  %458 = vmatprep.mubr.f32.mxu0 0.0
  %459 = vmatmul.mubr.f32.gmra.mrb[0].mxu0 %v383
  %v460 = vpop.f32.mrb[0].mxu0
  %v461 = vadd.f32 0.0, %v460
  %v462 = vpop.f32.mrb[0].mxu0
  %463 = vdwg.mxu0
  %v464 = vmul.f32 %v456, 0.25
  %v465 = vmul.f32 %v461, 0.25
  %v466 = vadd.f32 %v464, %v22
  %v467 = vadd.f32 %v465, %v23
  %v468 = vsel %vm176, %v466, -inf
  %469 = vmax.xlane.f32.xlu0 %v468
  %v470 = vpop.xlane.xlu0 %469
  %v471 = vsel %vm176, %v467, -inf
  %472 = vmax.xlane.f32.xlu0 %v471
  %v473 = vpop.xlane.xlu0 %472
  %v474 = vsub.f32 %v466, %v470
  %v475 = vsub.f32 %v467, %v473
  %v476 = vmul.f32 %v474, 1.442695
  %v477 = vpow.pop %v476
  %v478 = vmul.f32 %v475, 1.442695
  %v479 = vpow.pop %v478
  %v480 = vsel %vm176, %v477, 0.0
  %481 = vadd.xlane.f32.xlu0 %v480
  %v482 = vpop.xlane.xlu0 %481
  %v483 = vsel %vm176, %v479, 0.0
  %484 = vadd.xlane.f32.xlu0 %v483
  %v485 = vpop.xlane.xlu0 %484
  %v486 = vrcp.pop %v482
  %v487 = vmul.f32 %v477, %v486
  %v488 = vrcp.pop %v485
  %v489 = vmul.f32 %v479, %v488
  %490 = vrot.lane.b32.xlu0 %v162, 48
  %v491 = vpop.permute.xlu0 %490
  %492 = vrot.lane.b32.xlu0 %v167, 48
  %v493 = vpop.permute.xlu0 %492
  %v497 = vsel %vm176, %v487, 0
  %v500 = vsel %vm176, %v489, 0
  %502 = vmatprep.subr.mxu0 0.0
  %503 = vmatpush1.msra.mxu0 %v491
  %504 = vmatprep.subr.mxu0 0.0
  %505 = vmatpush1.msra.mxu0 %v493
  %506 = vmatprep.subr.mxu0 0.0
  %507 = vmatpush1.msra.mxu0 0.0
  %508 = vmatprep.subr.mxu0 0.0
  %509 = vmatpush1.msra.mxu0 0.0
  %510 = vmatprep.subr.mxu0 0.0
  %511 = vmatpush1.msra.mxu0 0.0
  %512 = vmatprep.subr.mxu0 0.0
  %513 = vmatpush1.msra.mxu0 0.0
  %514 = vmatprep.subr.mxu0 0.0
  %515 = vmatpush1.msra.mxu0 0.0
  %516 = vmatprep.subr.mxu0 0.0
  %517 = vmatpush1.msra.mxu0 0.0
  %518 = vmatprep.subr.mxu0 0.0
  %519 = vmatpush1.msra.mxu0 0.0
  %520 = vmatprep.subr.mxu0 0.0
  %521 = vmatpush1.msra.mxu0 0.0
  %522 = vmatprep.subr.mxu0 0.0
  %523 = vmatpush1.msra.mxu0 0.0
  %524 = vmatprep.subr.mxu0 0.0
  %525 = vmatpush1.msra.mxu0 0.0
  %526 = vmatprep.subr.mxu0 0.0
  %527 = vmatpush1.msra.mxu0 0.0
  %528 = vmatprep.subr.mxu0 0.0
  %529 = vmatpush1.msra.mxu0 0.0
  %530 = vmatprep.subr.mxu0 0.0
  %531 = vmatpush1.msra.mxu0 0.0
  %532 = vmatprep.subr.mxu0 0.0
  %533 = vmatpush1.msra.mxu0 0.0
  %534 = vmatprep.subr.mxu0 0.0
  %535 = vmatpush1.msra.mxu0 0.0
  %536 = vmatprep.subr.mxu0 0.0
  %537 = vmatpush1.msra.mxu0 0.0
  %538 = vmatprep.subr.mxu0 0.0
  %539 = vmatpush1.msra.mxu0 0.0
  %540 = vmatprep.subr.mxu0 0.0
  %541 = vmatpush1.msra.mxu0 0.0
  %542 = vmatprep.subr.mxu0 0.0
  %543 = vmatpush1.msra.mxu0 0.0
  %544 = vmatprep.subr.mxu0 0.0
  %545 = vmatpush1.msra.mxu0 0.0
  %546 = vmatprep.subr.mxu0 0.0
  %547 = vmatpush1.msra.mxu0 0.0
  %548 = vmatprep.subr.mxu0 0.0
  %549 = vmatpush1.msra.mxu0 0.0
  %550 = vmatprep.subr.mxu0 0.0
  %551 = vmatpush1.msra.mxu0 0.0
  %552 = vmatprep.subr.mxu0 0.0
  %553 = vmatpush1.msra.mxu0 0.0
  %554 = vmatprep.subr.mxu0 0.0
  %555 = vmatpush1.msra.mxu0 0.0
  %556 = vmatprep.subr.mxu0 0.0
  %557 = vmatpush1.msra.mxu0 0.0
  %558 = vmatprep.subr.mxu0 0.0
  %559 = vmatpush1.msra.mxu0 0.0
  %560 = vmatprep.subr.mxu0 0.0
  %561 = vmatpush1.msra.mxu0 0.0
  %562 = vmatprep.subr.mxu0 0.0
  %563 = vmatpush1.msra.mxu0 0.0
  %564 = vmatprep.subr.mxu0 0.0
  %565 = vmatpush1.msra.mxu0 0.0
  %566 = vmatprep.mubr.f32.mxu0 0.0
  %567 = vmatmul.mubr.f32.gmra.mrb[0].mxu0 %v497
  %v568 = vpop.f32.mrb[0].mxu0
  %v569 = vadd.f32 0.0, %v568
  %v570 = vpop.f32.mrb[0].mxu0
  %571 = vmatprep.mubr.f32.mxu0 0.0
  %572 = vmatmul.mubr.f32.gmra.mrb[0].mxu0 %v500
  %v573 = vpop.f32.mrb[0].mxu0
  %v574 = vadd.f32 0.0, %v573
  %v575 = vpop.f32.mrb[0].mxu0
  %576 = vdwg.mxu0
  %579 = vrot.lane.b32.xlu0 %v28, 32
  %v580 = vpop.permute.xlu0 %579
  %581 = vrot.lane.b32.xlu0 %v30, 32
  %v582 = vpop.permute.xlu0 %581
  %v586 = vsel %vm176, %v569, 0
  %v589 = vsel %vm176, %v574, 0
  %591 = vmatprep.subr.mxu0 0.0
  %592 = vmatpush1.msra.mxu0 %v580
  %593 = vmatprep.subr.mxu0 0.0
  %594 = vmatpush1.msra.mxu0 %v582
  %595 = vmatprep.subr.mxu0 0.0
  %596 = vmatpush1.msra.mxu0 0.0
  %597 = vmatprep.subr.mxu0 0.0
  %598 = vmatpush1.msra.mxu0 0.0
  %599 = vmatprep.subr.mxu0 0.0
  %600 = vmatpush1.msra.mxu0 0.0
  %601 = vmatprep.subr.mxu0 0.0
  %602 = vmatpush1.msra.mxu0 0.0
  %603 = vmatprep.subr.mxu0 0.0
  %604 = vmatpush1.msra.mxu0 0.0
  %605 = vmatprep.subr.mxu0 0.0
  %606 = vmatpush1.msra.mxu0 0.0
  %607 = vmatprep.subr.mxu0 0.0
  %608 = vmatpush1.msra.mxu0 0.0
  %609 = vmatprep.subr.mxu0 0.0
  %610 = vmatpush1.msra.mxu0 0.0
  %611 = vmatprep.subr.mxu0 0.0
  %612 = vmatpush1.msra.mxu0 0.0
  %613 = vmatprep.subr.mxu0 0.0
  %614 = vmatpush1.msra.mxu0 0.0
  %615 = vmatprep.subr.mxu0 0.0
  %616 = vmatpush1.msra.mxu0 0.0
  %617 = vmatprep.subr.mxu0 0.0
  %618 = vmatpush1.msra.mxu0 0.0
  %619 = vmatprep.subr.mxu0 0.0
  %620 = vmatpush1.msra.mxu0 0.0
  %621 = vmatprep.subr.mxu0 0.0
  %622 = vmatpush1.msra.mxu0 0.0
  %623 = vmatprep.subr.mxu0 0.0
  %624 = vmatpush1.msra.mxu0 0.0
  %625 = vmatprep.subr.mxu0 0.0
  %626 = vmatpush1.msra.mxu0 0.0
  %627 = vmatprep.subr.mxu0 0.0
  %628 = vmatpush1.msra.mxu0 0.0
  %629 = vmatprep.subr.mxu0 0.0
  %630 = vmatpush1.msra.mxu0 0.0
  %631 = vmatprep.subr.mxu0 0.0
  %632 = vmatpush1.msra.mxu0 0.0
  %633 = vmatprep.subr.mxu0 0.0
  %634 = vmatpush1.msra.mxu0 0.0
  %635 = vmatprep.subr.mxu0 0.0
  %636 = vmatpush1.msra.mxu0 0.0
  %637 = vmatprep.subr.mxu0 0.0
  %638 = vmatpush1.msra.mxu0 0.0
  %639 = vmatprep.subr.mxu0 0.0
  %640 = vmatpush1.msra.mxu0 0.0
  %641 = vmatprep.subr.mxu0 0.0
  %642 = vmatpush1.msra.mxu0 0.0
  %643 = vmatprep.subr.mxu0 0.0
  %644 = vmatpush1.msra.mxu0 0.0
  %645 = vmatprep.subr.mxu0 0.0
  %646 = vmatpush1.msra.mxu0 0.0
  %647 = vmatprep.subr.mxu0 0.0
  %648 = vmatpush1.msra.mxu0 0.0
  %649 = vmatprep.subr.mxu0 0.0
  %650 = vmatpush1.msra.mxu0 0.0
  %651 = vmatprep.subr.mxu0 0.0
  %652 = vmatpush1.msra.mxu0 0.0
  %653 = vmatprep.subr.mxu0 0.0
  %654 = vmatpush1.msra.mxu0 0.0
  %655 = vmatprep.mubr.f32.mxu0 0.0
  %656 = vmatmul.mubr.f32.gmra.mrb[0].mxu0 %v586
  %v657 = vpop.f32.mrb[0].mxu0
  %v658 = vadd.f32 0.0, %v657
  %v659 = vpop.f32.mrb[0].mxu0
  %660 = vmatprep.mubr.f32.mxu0 0.0
  %661 = vmatmul.mubr.f32.gmra.mrb[0].mxu0 %v589
  %v662 = vpop.f32.mrb[0].mxu0
  %v663 = vadd.f32 0.0, %v662
  %v664 = vpop.f32.mrb[0].mxu0
  %665 = vdwg.mxu0
  %668 = vrot.lane.b32.xlu0 %v24, 32
  %v669 = vpop.permute.xlu0 %668
  %670 = vrot.lane.b32.xlu0 %v26, 32
  %v671 = vpop.permute.xlu0 %670
  %v675 = vsel %vm176, %v365, 0
  %v678 = vsel %vm176, %v370, 0
  %680 = vmatprep.subr.mxu0 0.0
  %681 = vmatpush1.msra.mxu0 %v669
  %682 = vmatprep.subr.mxu0 0.0
  %683 = vmatpush1.msra.mxu0 %v671
  %684 = vmatprep.subr.mxu0 0.0
  %685 = vmatpush1.msra.mxu0 0.0
  %686 = vmatprep.subr.mxu0 0.0
  %687 = vmatpush1.msra.mxu0 0.0
  %688 = vmatprep.subr.mxu0 0.0
  %689 = vmatpush1.msra.mxu0 0.0
  %690 = vmatprep.subr.mxu0 0.0
  %691 = vmatpush1.msra.mxu0 0.0
  %692 = vmatprep.subr.mxu0 0.0
  %693 = vmatpush1.msra.mxu0 0.0
  %694 = vmatprep.subr.mxu0 0.0
  %695 = vmatpush1.msra.mxu0 0.0
  %696 = vmatprep.subr.mxu0 0.0
  %697 = vmatpush1.msra.mxu0 0.0
  %698 = vmatprep.subr.mxu0 0.0
  %699 = vmatpush1.msra.mxu0 0.0
  %700 = vmatprep.subr.mxu0 0.0
  %701 = vmatpush1.msra.mxu0 0.0
  %702 = vmatprep.subr.mxu0 0.0
  %703 = vmatpush1.msra.mxu0 0.0
  %704 = vmatprep.subr.mxu0 0.0
  %705 = vmatpush1.msra.mxu0 0.0
  %706 = vmatprep.subr.mxu0 0.0
  %707 = vmatpush1.msra.mxu0 0.0
  %708 = vmatprep.subr.mxu0 0.0
  %709 = vmatpush1.msra.mxu0 0.0
  %710 = vmatprep.subr.mxu0 0.0
  %711 = vmatpush1.msra.mxu0 0.0
  %712 = vmatprep.subr.mxu0 0.0
  %713 = vmatpush1.msra.mxu0 0.0
  %714 = vmatprep.subr.mxu0 0.0
  %715 = vmatpush1.msra.mxu0 0.0
  %716 = vmatprep.subr.mxu0 0.0
  %717 = vmatpush1.msra.mxu0 0.0
  %718 = vmatprep.subr.mxu0 0.0
  %719 = vmatpush1.msra.mxu0 0.0
  %720 = vmatprep.subr.mxu0 0.0
  %721 = vmatpush1.msra.mxu0 0.0
  %722 = vmatprep.subr.mxu0 0.0
  %723 = vmatpush1.msra.mxu0 0.0
  %724 = vmatprep.subr.mxu0 0.0
  %725 = vmatpush1.msra.mxu0 0.0
  %726 = vmatprep.subr.mxu0 0.0
  %727 = vmatpush1.msra.mxu0 0.0
  %728 = vmatprep.subr.mxu0 0.0
  %729 = vmatpush1.msra.mxu0 0.0
  %730 = vmatprep.subr.mxu0 0.0
  %731 = vmatpush1.msra.mxu0 0.0
  %732 = vmatprep.subr.mxu0 0.0
  %733 = vmatpush1.msra.mxu0 0.0
  %734 = vmatprep.subr.mxu0 0.0
  %735 = vmatpush1.msra.mxu0 0.0
  %736 = vmatprep.subr.mxu0 0.0
  %737 = vmatpush1.msra.mxu0 0.0
  %738 = vmatprep.subr.mxu0 0.0
  %739 = vmatpush1.msra.mxu0 0.0
  %740 = vmatprep.subr.mxu0 0.0
  %741 = vmatpush1.msra.mxu0 0.0
  %742 = vmatprep.subr.mxu0 0.0
  %743 = vmatpush1.msra.mxu0 0.0
  %744 = vmatprep.mubr.f32.mxu0 0.0
  %745 = vmatmul.mubr.f32.gmra.mrb[0].mxu0 %v675
  %v746 = vpop.f32.mrb[0].mxu0
  %v747 = vadd.f32 %v658, %v746
  %v748 = vpop.f32.mrb[0].mxu0
  %749 = vmatprep.mubr.f32.mxu0 0.0
  %750 = vmatmul.mubr.f32.gmra.mrb[0].mxu0 %v678
  %v751 = vpop.f32.mrb[0].mxu0
  %v752 = vadd.f32 %v663, %v751
  %v753 = vpop.f32.mrb[0].mxu0
  %754 = vdwg.mxu0
  %v755 = vlaneseq
  %v756 = vshrl.u32 %v755, 7
  %v757 = vsub.s32 1, %v756
  %v758 = vrot.slane %v82, %v757
  %v759 = vadd.f32 %v747, %v758
  %v760 = vadd.f32 %v752, %v758
  %v761 = vadd.f32 %v20, %v759
  %v762 = vadd.f32 %v21, %v760
  %v763 = vsel %vm88, %v761, 0.0
  %764 = vadd.xlane.f32.xlu0 %v763
  %v765 = vpop.xlane.xlu0 %764
  %v766 = vsel %vm88, %v762, 0.0
  %767 = vadd.xlane.f32.xlu0 %v766
  %v768 = vpop.xlane.xlu0 %767
  %v769 = vrcp.pop 32.0
  %v770 = vmul.f32 %v765, %v769
  %v771 = vmul.f32 %v768, %v769
  %v772 = vsub.f32 %v761, %v770
  %v773 = vsub.f32 %v762, %v771
  %v774 = vmul.f32 %v772, %v772
  %v775 = vmul.f32 %v773, %v773
  %v776 = vsel %vm88, %v774, 0.0
  %777 = vadd.xlane.f32.xlu0 %v776
  %v778 = vpop.xlane.xlu0 %777
  %v779 = vsel %vm88, %v775, 0.0
  %780 = vadd.xlane.f32.xlu0 %v779
  %v781 = vpop.xlane.xlu0 %780
  %v782 = vmul.f32 %v778, %v769
  %v783 = vmul.f32 %v781, %v769
  %v784 = vadd.f32 %v782, 1e-12
  %v785 = vadd.f32 %v783, 1e-12
  %v786 = vrsqrt.pop %v784
  %v787 = vrsqrt.pop %v785
  %v788 = vmul.f32 %v772, %v786
  %v789 = vmul.f32 %v773, %v787
  %v790 = vlaneseq
  %v791 = vshrl.u32 %v790, 7
  %v792 = vsub.s32 2, %v791
  %v793 = vrot.slane %v82, %v792
  %v794 = vmul.f32 %v788, %v793
  %v795 = vmul.f32 %v789, %v793
  %v796 = vlaneseq
  %v797 = vshrl.u32 %v796, 7
  %v798 = vsub.s32 3, %v797
  %v799 = vrot.slane %v82, %v798
  %v800 = vadd.f32 %v794, %v799
  %v801 = vadd.f32 %v795, %v799
  %v802 = vlaneseq
  %v803 = vshrl.u32 %v802, 7
  %v804 = vsub.s32 4, %v803
  %v805 = vrot.slane %v82, %v804
  %v807 = vsel %vm88, %v800, 0
  %v810 = vsel %vm88, %v801, 0
  %812 = vmatprep.subr.mxu0 0.0
  %813 = vmatpush1.msra.mxu0 %v25
  %814 = vmatprep.subr.mxu0 0.0
  %815 = vmatpush1.msra.mxu0 %v27
  %816 = vmatprep.subr.mxu0 0.0
  %817 = vmatpush1.msra.mxu0 %v29
  %818 = vmatprep.subr.mxu0 0.0
  %819 = vmatpush1.msra.mxu0 %v31
  %820 = vmatprep.subr.mxu0 0.0
  %821 = vmatpush1.msra.mxu0 0.0
  %822 = vmatprep.subr.mxu0 0.0
  %823 = vmatpush1.msra.mxu0 0.0
  %824 = vmatprep.subr.mxu0 0.0
  %825 = vmatpush1.msra.mxu0 0.0
  %826 = vmatprep.subr.mxu0 0.0
  %827 = vmatpush1.msra.mxu0 0.0
  %828 = vmatprep.subr.mxu0 0.0
  %829 = vmatpush1.msra.mxu0 0.0
  %830 = vmatprep.subr.mxu0 0.0
  %831 = vmatpush1.msra.mxu0 0.0
  %832 = vmatprep.subr.mxu0 0.0
  %833 = vmatpush1.msra.mxu0 0.0
  %834 = vmatprep.subr.mxu0 0.0
  %835 = vmatpush1.msra.mxu0 0.0
  %836 = vmatprep.subr.mxu0 0.0
  %837 = vmatpush1.msra.mxu0 0.0
  %838 = vmatprep.subr.mxu0 0.0
  %839 = vmatpush1.msra.mxu0 0.0
  %840 = vmatprep.subr.mxu0 0.0
  %841 = vmatpush1.msra.mxu0 0.0
  %842 = vmatprep.subr.mxu0 0.0
  %843 = vmatpush1.msra.mxu0 0.0
  %844 = vmatprep.subr.mxu0 0.0
  %845 = vmatpush1.msra.mxu0 0.0
  %846 = vmatprep.subr.mxu0 0.0
  %847 = vmatpush1.msra.mxu0 0.0
  %848 = vmatprep.subr.mxu0 0.0
  %849 = vmatpush1.msra.mxu0 0.0
  %850 = vmatprep.subr.mxu0 0.0
  %851 = vmatpush1.msra.mxu0 0.0
  %852 = vmatprep.subr.mxu0 0.0
  %853 = vmatpush1.msra.mxu0 0.0
  %854 = vmatprep.subr.mxu0 0.0
  %855 = vmatpush1.msra.mxu0 0.0
  %856 = vmatprep.subr.mxu0 0.0
  %857 = vmatpush1.msra.mxu0 0.0
  %858 = vmatprep.subr.mxu0 0.0
  %859 = vmatpush1.msra.mxu0 0.0
  %860 = vmatprep.subr.mxu0 0.0
  %861 = vmatpush1.msra.mxu0 0.0
  %862 = vmatprep.subr.mxu0 0.0
  %863 = vmatpush1.msra.mxu0 0.0
  %864 = vmatprep.subr.mxu0 0.0
  %865 = vmatpush1.msra.mxu0 0.0
  %866 = vmatprep.subr.mxu0 0.0
  %867 = vmatpush1.msra.mxu0 0.0
  %868 = vmatprep.subr.mxu0 0.0
  %869 = vmatpush1.msra.mxu0 0.0
  %870 = vmatprep.subr.mxu0 0.0
  %871 = vmatpush1.msra.mxu0 0.0
  %872 = vmatprep.subr.mxu0 0.0
  %873 = vmatpush1.msra.mxu0 0.0
  %874 = vmatprep.subr.mxu0 0.0
  %875 = vmatpush1.msra.mxu0 0.0
  %876 = vmatprep.mubr.f32.mxu0 0.0
  %877 = vmatmul.mubr.f32.gmra.mrb[0].mxu0 %v807
  %v878 = vpop.f32.mrb[0].mxu0
  %v879 = vadd.f32 %v805, %v878
  %v880 = vpop.f32.mrb[0].mxu0
  %881 = vmatprep.mubr.f32.mxu0 0.0
  %882 = vmatmul.mubr.f32.gmra.mrb[0].mxu0 %v810
  %v883 = vpop.f32.mrb[0].mxu0
  %v884 = vadd.f32 %v805, %v883
  %v885 = vpop.f32.mrb[0].mxu0
  %886 = vdwg.mxu0
  %v887 = vmul.f32 %v879, %v879
  %v888 = vmul.f32 %v884, %v884
  %v889 = vmul.f32 %v879, %v887
  %v890 = vmul.f32 %v884, %v888
  %v891 = vmul.f32 %v889, 0.044715
  %v892 = vmul.f32 %v890, 0.044715
  %v893 = vadd.f32 %v879, %v891
  %v894 = vadd.f32 %v884, %v892
  %v895 = vmul.f32 %v893, 0.7978846
  %v896 = vmul.f32 %v894, 0.7978846
  %v897 = vtanh.pop %v895
  %v898 = vtanh.pop %v896
  %v899 = vadd.f32 %v897, 1.0
  %v900 = vadd.f32 %v898, 1.0
  %v901 = vmul.f32 %v899, 0.5
  %v902 = vmul.f32 %v900, 0.5
  %v903 = vmul.f32 %v879, %v901
  %v904 = vmul.f32 %v884, %v902
  %v905 = vlaneseq
  %v906 = vshrl.u32 %v905, 7
  %v907 = vsub.s32 5, %v906
  %v908 = vrot.slane %v82, %v907
  %vm909 = vcmask 523264
  %v911 = vsel %vm909, %v903, 0
  %v914 = vsel %vm909, %v904, 0
  %916 = vmatprep.subr.mxu0 0.0
  %917 = vmatpush1.msra.mxu0 %v37
  %918 = vmatprep.subr.mxu0 0.0
  %919 = vmatpush1.msra.mxu0 %v43
  %920 = vmatprep.subr.mxu0 0.0
  %921 = vmatpush1.msra.mxu0 %v49
  %922 = vmatprep.subr.mxu0 0.0
  %923 = vmatpush1.msra.mxu0 %v55
  %924 = vmatprep.subr.mxu0 0.0
  %925 = vmatpush1.msra.mxu0 %v61
  %926 = vmatprep.subr.mxu0 0.0
  %927 = vmatpush1.msra.mxu0 %v67
  %928 = vmatprep.subr.mxu0 0.0
  %929 = vmatpush1.msra.mxu0 %v73
  %930 = vmatprep.subr.mxu0 0.0
  %931 = vmatpush1.msra.mxu0 %v79
  %932 = vmatprep.subr.mxu0 0.0
  %933 = vmatpush1.msra.mxu0 0.0
  %934 = vmatprep.subr.mxu0 0.0
  %935 = vmatpush1.msra.mxu0 0.0
  %936 = vmatprep.subr.mxu0 0.0
  %937 = vmatpush1.msra.mxu0 0.0
  %938 = vmatprep.subr.mxu0 0.0
  %939 = vmatpush1.msra.mxu0 0.0
  %940 = vmatprep.subr.mxu0 0.0
  %941 = vmatpush1.msra.mxu0 0.0
  %942 = vmatprep.subr.mxu0 0.0
  %943 = vmatpush1.msra.mxu0 0.0
  %944 = vmatprep.subr.mxu0 0.0
  %945 = vmatpush1.msra.mxu0 0.0
  %946 = vmatprep.subr.mxu0 0.0
  %947 = vmatpush1.msra.mxu0 0.0
  %948 = vmatprep.subr.mxu0 0.0
  %949 = vmatpush1.msra.mxu0 0.0
  %950 = vmatprep.subr.mxu0 0.0
  %951 = vmatpush1.msra.mxu0 0.0
  %952 = vmatprep.subr.mxu0 0.0
  %953 = vmatpush1.msra.mxu0 0.0
  %954 = vmatprep.subr.mxu0 0.0
  %955 = vmatpush1.msra.mxu0 0.0
  %956 = vmatprep.subr.mxu0 0.0
  %957 = vmatpush1.msra.mxu0 0.0
  %958 = vmatprep.subr.mxu0 0.0
  %959 = vmatpush1.msra.mxu0 0.0
  %960 = vmatprep.subr.mxu0 0.0
  %961 = vmatpush1.msra.mxu0 0.0
  %962 = vmatprep.subr.mxu0 0.0
  %963 = vmatpush1.msra.mxu0 0.0
  %964 = vmatprep.subr.mxu0 0.0
  %965 = vmatpush1.msra.mxu0 0.0
  %966 = vmatprep.subr.mxu0 0.0
  %967 = vmatpush1.msra.mxu0 0.0
  %968 = vmatprep.subr.mxu0 0.0
  %969 = vmatpush1.msra.mxu0 0.0
  %970 = vmatprep.subr.mxu0 0.0
  %971 = vmatpush1.msra.mxu0 0.0
  %972 = vmatprep.subr.mxu0 0.0
  %973 = vmatpush1.msra.mxu0 0.0
  %974 = vmatprep.subr.mxu0 0.0
  %975 = vmatpush1.msra.mxu0 0.0
  %976 = vmatprep.subr.mxu0 0.0
  %977 = vmatpush1.msra.mxu0 0.0
  %978 = vmatprep.subr.mxu0 0.0
  %979 = vmatpush1.msra.mxu0 0.0
  %980 = vmatprep.mubr.f32.mxu0 0.0
  %981 = vmatmul.mubr.f32.gmra.mrb[0].mxu0 %v911
  %v982 = vpop.f32.mrb[0].mxu0
  %v983 = vadd.f32 %v908, %v982
  %v984 = vpop.f32.mrb[0].mxu0
  %985 = vmatprep.mubr.f32.mxu0 0.0
  %986 = vmatmul.mubr.f32.gmra.mrb[0].mxu0 %v914
  %v987 = vpop.f32.mrb[0].mxu0
  %v988 = vadd.f32 %v908, %v987
  %v989 = vpop.f32.mrb[0].mxu0
  %990 = vdwg.mxu0
  %v991 = vadd.f32 %v800, %v983
  %v992 = vadd.f32 %v801, %v988
  %v993 = vsel %vm88, %v991, 0.0
  %994 = vadd.xlane.f32.xlu0 %v993
  %v995 = vpop.xlane.xlu0 %994
  %v996 = vsel %vm88, %v992, 0.0
  %997 = vadd.xlane.f32.xlu0 %v996
  %v998 = vpop.xlane.xlu0 %997
  %v999 = vmul.f32 %v995, %v769
  %v1000 = vmul.f32 %v998, %v769
  %v1001 = vsub.f32 %v991, %v999
  %v1002 = vsub.f32 %v992, %v1000
  %v1003 = vmul.f32 %v1001, %v1001
  %v1004 = vmul.f32 %v1002, %v1002
  %v1005 = vsel %vm88, %v1003, 0.0
  %1006 = vadd.xlane.f32.xlu0 %v1005
  %v1007 = vpop.xlane.xlu0 %1006
  %v1008 = vsel %vm88, %v1004, 0.0
  %1009 = vadd.xlane.f32.xlu0 %v1008
  %v1010 = vpop.xlane.xlu0 %1009
  %v1011 = vmul.f32 %v1007, %v769
  %v1012 = vmul.f32 %v1010, %v769
  %v1013 = vadd.f32 %v1011, 1e-12
  %v1014 = vadd.f32 %v1012, 1e-12
  %v1015 = vrsqrt.pop %v1013
  %v1016 = vrsqrt.pop %v1014
  %v1017 = vmul.f32 %v1001, %v1015
  %v1018 = vmul.f32 %v1002, %v1016
  %v1019 = vlaneseq
  %v1020 = vshrl.u32 %v1019, 7
  %v1021 = vsub.s32 6, %v1020
  %v1022 = vrot.slane %v82, %v1021
  %v1023 = vmul.f32 %v1017, %v1022
  %v1024 = vmul.f32 %v1018, %v1022
  %v1025 = vlaneseq
  %v1026 = vshrl.u32 %v1025, 7
  %v1027 = vsub.s32 7, %v1026
  %v1028 = vrot.slane %v82, %v1027
  %v1029 = vadd.f32 %v1023, %v1028
  %v1030 = vadd.f32 %v1024, %v1028
  %v1033 = vrot.slane %v1029, 7
  %v1034 = vrot.slane %v1030, 7
  %v1037 = vrot.slane %v1029, 5
  %v1038 = vrot.slane %v1030, 5
  %v1041 = vrot.slane %v1029, 3
  %v1042 = vrot.slane %v1030, 3
  %v1045 = vrot.slane %v1029, 1
  %v1046 = vrot.slane %v1030, 1
  %vm1049 = vcmask 1040384
  %v1050 = vsel %vm1049, %v1033, %v1037
  %v1051 = vsel %vm1049, %v1034, %v1038
  %vm1052 = vcmask 1041408
  %v1053 = vsel %vm1052, %v1050, %v1041
  %v1054 = vsel %vm1052, %v1051, %v1042
  %vm1055 = vcmask 1042432
  %v1056 = vsel %vm1055, %v1053, %v1045
  %v1057 = vsel %vm1055, %v1054, %v1046
  %vm1058 = vcmask 1043456
  %v1059 = vsel %vm1058, %v1056, %v1033
  %v1060 = vsel %vm1058, %v1057, %v1034
  %vm1061 = vcmask 1044480
  %v1062 = vsel %vm1061, %v1059, %v1037
  %v1063 = vsel %vm1061, %v1060, %v1038
  %vm1064 = vcmask 1045504
  %v1065 = vsel %vm1064, %v1062, %v1041
  %v1066 = vsel %vm1064, %v1063, %v1042
  %vm1067 = vcmask 1046528
  %v1068 = vsel %vm1067, %v1065, %v1045
  %v1069 = vsel %vm1067, %v1066, %v1046
  %1072 = vrot.lane.b32.xlu0 %v1068, 32
  %v1073 = vpop.permute.xlu0 %1072
  %1074 = vrot.lane.b32.xlu0 %v1069, 32
  %v1075 = vpop.permute.xlu0 %1074
  %v1078 = vsel %vm88, %v1029, %v1073
  %v1079 = vsel %vm88, %v1030, %v1075
  %v1080 = vlaneseq
  %v1081 = vshrl.u32 %v1080, 7
  %v1082 = vsub.s32 0, %v1081
  %v1083 = vrot.slane %v80, %v1082
  %v1084 = vlaneseq
  %v1085 = vshrl.u32 %v1084, 7
  %v1086 = vsub.s32 0, %v1085
  %v1087 = vrot.slane %v81, %v1086
  %v1089 = vsel %vm909, %v1078, 0
  %v1092 = vsel %vm909, %v1079, 0
  %1094 = vmatprep.subr.mxu0 %v33
  %1095 = vmatpush1.msra.mxu0 %v32
  %1096 = vmatprep.subr.mxu0 %v39
  %1097 = vmatpush1.msra.mxu0 %v38
  %1098 = vmatprep.subr.mxu0 %v45
  %1099 = vmatpush1.msra.mxu0 %v44
  %1100 = vmatprep.subr.mxu0 %v51
  %1101 = vmatpush1.msra.mxu0 %v50
  %1102 = vmatprep.subr.mxu0 %v57
  %1103 = vmatpush1.msra.mxu0 %v56
  %1104 = vmatprep.subr.mxu0 %v63
  %1105 = vmatpush1.msra.mxu0 %v62
  %1106 = vmatprep.subr.mxu0 %v69
  %1107 = vmatpush1.msra.mxu0 %v68
  %1108 = vmatprep.subr.mxu0 %v75
  %1109 = vmatpush1.msra.mxu0 %v74
  %1110 = vmatprep.subr.mxu0 0.0
  %1111 = vmatpush1.msra.mxu0 0.0
  %1112 = vmatprep.subr.mxu0 0.0
  %1113 = vmatpush1.msra.mxu0 0.0
  %1114 = vmatprep.subr.mxu0 0.0
  %1115 = vmatpush1.msra.mxu0 0.0
  %1116 = vmatprep.subr.mxu0 0.0
  %1117 = vmatpush1.msra.mxu0 0.0
  %1118 = vmatprep.subr.mxu0 0.0
  %1119 = vmatpush1.msra.mxu0 0.0
  %1120 = vmatprep.subr.mxu0 0.0
  %1121 = vmatpush1.msra.mxu0 0.0
  %1122 = vmatprep.subr.mxu0 0.0
  %1123 = vmatpush1.msra.mxu0 0.0
  %1124 = vmatprep.subr.mxu0 0.0
  %1125 = vmatpush1.msra.mxu0 0.0
  %1126 = vmatprep.subr.mxu0 0.0
  %1127 = vmatpush1.msra.mxu0 0.0
  %1128 = vmatprep.subr.mxu0 0.0
  %1129 = vmatpush1.msra.mxu0 0.0
  %1130 = vmatprep.subr.mxu0 0.0
  %1131 = vmatpush1.msra.mxu0 0.0
  %1132 = vmatprep.subr.mxu0 0.0
  %1133 = vmatpush1.msra.mxu0 0.0
  %1134 = vmatprep.subr.mxu0 0.0
  %1135 = vmatpush1.msra.mxu0 0.0
  %1136 = vmatprep.subr.mxu0 0.0
  %1137 = vmatpush1.msra.mxu0 0.0
  %1138 = vmatprep.subr.mxu0 0.0
  %1139 = vmatpush1.msra.mxu0 0.0
  %1140 = vmatprep.subr.mxu0 0.0
  %1141 = vmatpush1.msra.mxu0 0.0
  %1142 = vmatprep.subr.mxu0 0.0
  %1143 = vmatpush1.msra.mxu0 0.0
  %1144 = vmatprep.subr.mxu0 0.0
  %1145 = vmatpush1.msra.mxu0 0.0
  %1146 = vmatprep.subr.mxu0 0.0
  %1147 = vmatpush1.msra.mxu0 0.0
  %1148 = vmatprep.subr.mxu0 0.0
  %1149 = vmatpush1.msra.mxu0 0.0
  %1150 = vmatprep.subr.mxu0 0.0
  %1151 = vmatpush1.msra.mxu0 0.0
  %1152 = vmatprep.subr.mxu0 0.0
  %1153 = vmatpush1.msra.mxu0 0.0
  %1154 = vmatprep.subr.mxu0 0.0
  %1155 = vmatpush1.msra.mxu0 0.0
  %1156 = vmatprep.subr.mxu0 0.0
  %1157 = vmatpush1.msra.mxu0 0.0
  %1158 = vmatprep.mubr.f32.mxu0 0.0
  %1159 = vmatmul.mubr.f32.gmra.mrb[0].mxu0 %v1089
  %v1160 = vpop.f32.mrb[0].mxu0
  %v1161 = vadd.f32 %v1083, %v1160
  %v1162 = vpop.f32.mrb[0].mxu0
  %v1163 = vadd.f32 %v1087, %v1162
  %1164 = vmatprep.mubr.f32.mxu0 0.0
  %1165 = vmatmul.mubr.f32.gmra.mrb[0].mxu0 %v1092
  %v1166 = vpop.f32.mrb[0].mxu0
  %v1167 = vadd.f32 %v1083, %v1166
  %v1168 = vpop.f32.mrb[0].mxu0
  %v1169 = vadd.f32 %v1087, %v1168
  %1170 = vdwg.mxu0
  %v1175 = vrot.slane %v1167, 7
  %vm1176 = vcmask 1041409
  %v1177 = vsel %vm1176, %v1175, %v1161
  %v1178 = vrot.slane %v1169, 7
  %v1179 = vsel %vm1176, %v1178, %v1163
  %v1183 = vsel %vm909, 0.0, 0
  %1185 = vmatprep.subr.mxu0 %v35
  %1186 = vmatpush1.msra.mxu0 %v34
  %1187 = vmatprep.subr.mxu0 %v41
  %1188 = vmatpush1.msra.mxu0 %v40
  %1189 = vmatprep.subr.mxu0 %v47
  %1190 = vmatpush1.msra.mxu0 %v46
  %1191 = vmatprep.subr.mxu0 %v53
  %1192 = vmatpush1.msra.mxu0 %v52
  %1193 = vmatprep.subr.mxu0 %v59
  %1194 = vmatpush1.msra.mxu0 %v58
  %1195 = vmatprep.subr.mxu0 %v65
  %1196 = vmatpush1.msra.mxu0 %v64
  %1197 = vmatprep.subr.mxu0 %v71
  %1198 = vmatpush1.msra.mxu0 %v70
  %1199 = vmatprep.subr.mxu0 %v77
  %1200 = vmatpush1.msra.mxu0 %v76
  %1201 = vmatprep.subr.mxu0 0.0
  %1202 = vmatpush1.msra.mxu0 0.0
  %1203 = vmatprep.subr.mxu0 0.0
  %1204 = vmatpush1.msra.mxu0 0.0
  %1205 = vmatprep.subr.mxu0 0.0
  %1206 = vmatpush1.msra.mxu0 0.0
  %1207 = vmatprep.subr.mxu0 0.0
  %1208 = vmatpush1.msra.mxu0 0.0
  %1209 = vmatprep.subr.mxu0 0.0
  %1210 = vmatpush1.msra.mxu0 0.0
  %1211 = vmatprep.subr.mxu0 0.0
  %1212 = vmatpush1.msra.mxu0 0.0
  %1213 = vmatprep.subr.mxu0 0.0
  %1214 = vmatpush1.msra.mxu0 0.0
  %1215 = vmatprep.subr.mxu0 0.0
  %1216 = vmatpush1.msra.mxu0 0.0
  %1217 = vmatprep.subr.mxu0 0.0
  %1218 = vmatpush1.msra.mxu0 0.0
  %1219 = vmatprep.subr.mxu0 0.0
  %1220 = vmatpush1.msra.mxu0 0.0
  %1221 = vmatprep.subr.mxu0 0.0
  %1222 = vmatpush1.msra.mxu0 0.0
  %1223 = vmatprep.subr.mxu0 0.0
  %1224 = vmatpush1.msra.mxu0 0.0
  %1225 = vmatprep.subr.mxu0 0.0
  %1226 = vmatpush1.msra.mxu0 0.0
  %1227 = vmatprep.subr.mxu0 0.0
  %1228 = vmatpush1.msra.mxu0 0.0
  %1229 = vmatprep.subr.mxu0 0.0
  %1230 = vmatpush1.msra.mxu0 0.0
  %1231 = vmatprep.subr.mxu0 0.0
  %1232 = vmatpush1.msra.mxu0 0.0
  %1233 = vmatprep.subr.mxu0 0.0
  %1234 = vmatpush1.msra.mxu0 0.0
  %1235 = vmatprep.subr.mxu0 0.0
  %1236 = vmatpush1.msra.mxu0 0.0
  %1237 = vmatprep.subr.mxu0 0.0
  %1238 = vmatpush1.msra.mxu0 0.0
  %1239 = vmatprep.subr.mxu0 0.0
  %1240 = vmatpush1.msra.mxu0 0.0
  %1241 = vmatprep.subr.mxu0 0.0
  %1242 = vmatpush1.msra.mxu0 0.0
  %1243 = vmatprep.subr.mxu0 0.0
  %1244 = vmatpush1.msra.mxu0 0.0
  %1245 = vmatprep.subr.mxu0 0.0
  %1246 = vmatpush1.msra.mxu0 0.0
  %1247 = vmatprep.subr.mxu0 0.0
  %1248 = vmatpush1.msra.mxu0 0.0
  %1249 = vmatprep.mubr.f32.mxu0 0.0
  %1250 = vmatmul.mubr.f32.gmra.mrb[0].mxu0 %v1183
  %v1251 = vpop.f32.mrb[0].mxu0
  %v1252 = vadd.f32 %v1177, %v1251
  %v1253 = vpop.f32.mrb[0].mxu0
  %v1254 = vadd.f32 %v1179, %v1253
  %1255 = vdwg.mxu0
  %v1256 = vxor.u32 %v1252, 2147483648
  %v1257 = vmul.f32 %v1256, 1.442695
  %v1258 = vpow.pop %v1257
  %v1259 = vadd.f32 %v1258, 1.0
  %v1260 = vrcp.pop %v1259
  %v1261 = vmul.f32 1.0, %v1260
  %v1262 = vtanh.pop %v1254
  %v1263 = vxor.u32 %v1254, 2147483648
  %v1264 = vmul.f32 %v1263, 1.442695
  %v1265 = vpow.pop %v1264
  %v1266 = vadd.f32 %v1265, 1.0
  %v1267 = vrcp.pop %v1266
  %v1268 = vmul.f32 1.0, %v1267
  %v1269 = vmul.f32 %v1261, 0.0
  %v1270 = vmul.f32 %v1261, %v1262
  %1272 = vrot.lane.b32.xlu0 %v1270, 64
  %v1273 = vpop.permute.xlu0 %1272
  %v1275 = vadd.f32 %v1269, %v1273
  %v1276 = vtanh.pop %v1275
  %v1277 = vmul.f32 %v1268, %v1276
  %1279 = vrot.lane.b32.xlu0 %v1277, 64
  %v1280 = vpop.permute.xlu0 %1279
  %v1281 = vrot.slane %v1161, 1
  %v1282 = vsel %vm1176, %v1167, %v1281
  %v1283 = vrot.slane %v1163, 1
  %v1284 = vsel %vm1176, %v1169, %v1283
  %v1287 = vsel %vm909, %v1280, 0
  %1289 = vmatprep.subr.mxu0 %v35
  %1290 = vmatpush1.msra.mxu0 %v34
  %1291 = vmatprep.subr.mxu0 %v41
  %1292 = vmatpush1.msra.mxu0 %v40
  %1293 = vmatprep.subr.mxu0 %v47
  %1294 = vmatpush1.msra.mxu0 %v46
  %1295 = vmatprep.subr.mxu0 %v53
  %1296 = vmatpush1.msra.mxu0 %v52
  %1297 = vmatprep.subr.mxu0 %v59
  %1298 = vmatpush1.msra.mxu0 %v58
  %1299 = vmatprep.subr.mxu0 %v65
  %1300 = vmatpush1.msra.mxu0 %v64
  %1301 = vmatprep.subr.mxu0 %v71
  %1302 = vmatpush1.msra.mxu0 %v70
  %1303 = vmatprep.subr.mxu0 %v77
  %1304 = vmatpush1.msra.mxu0 %v76
  %1305 = vmatprep.subr.mxu0 0.0
  %1306 = vmatpush1.msra.mxu0 0.0
  %1307 = vmatprep.subr.mxu0 0.0
  %1308 = vmatpush1.msra.mxu0 0.0
  %1309 = vmatprep.subr.mxu0 0.0
  %1310 = vmatpush1.msra.mxu0 0.0
  %1311 = vmatprep.subr.mxu0 0.0
  %1312 = vmatpush1.msra.mxu0 0.0
  %1313 = vmatprep.subr.mxu0 0.0
  %1314 = vmatpush1.msra.mxu0 0.0
  %1315 = vmatprep.subr.mxu0 0.0
  %1316 = vmatpush1.msra.mxu0 0.0
  %1317 = vmatprep.subr.mxu0 0.0
  %1318 = vmatpush1.msra.mxu0 0.0
  %1319 = vmatprep.subr.mxu0 0.0
  %1320 = vmatpush1.msra.mxu0 0.0
  %1321 = vmatprep.subr.mxu0 0.0
  %1322 = vmatpush1.msra.mxu0 0.0
  %1323 = vmatprep.subr.mxu0 0.0
  %1324 = vmatpush1.msra.mxu0 0.0
  %1325 = vmatprep.subr.mxu0 0.0
  %1326 = vmatpush1.msra.mxu0 0.0
  %1327 = vmatprep.subr.mxu0 0.0
  %1328 = vmatpush1.msra.mxu0 0.0
  %1329 = vmatprep.subr.mxu0 0.0
  %1330 = vmatpush1.msra.mxu0 0.0
  %1331 = vmatprep.subr.mxu0 0.0
  %1332 = vmatpush1.msra.mxu0 0.0
  %1333 = vmatprep.subr.mxu0 0.0
  %1334 = vmatpush1.msra.mxu0 0.0
  %1335 = vmatprep.subr.mxu0 0.0
  %1336 = vmatpush1.msra.mxu0 0.0
  %1337 = vmatprep.subr.mxu0 0.0
  %1338 = vmatpush1.msra.mxu0 0.0
  %1339 = vmatprep.subr.mxu0 0.0
  %1340 = vmatpush1.msra.mxu0 0.0
  %1341 = vmatprep.subr.mxu0 0.0
  %1342 = vmatpush1.msra.mxu0 0.0
  %1343 = vmatprep.subr.mxu0 0.0
  %1344 = vmatpush1.msra.mxu0 0.0
  %1345 = vmatprep.subr.mxu0 0.0
  %1346 = vmatpush1.msra.mxu0 0.0
  %1347 = vmatprep.subr.mxu0 0.0
  %1348 = vmatpush1.msra.mxu0 0.0
  %1349 = vmatprep.subr.mxu0 0.0
  %1350 = vmatpush1.msra.mxu0 0.0
  %1351 = vmatprep.subr.mxu0 0.0
  %1352 = vmatpush1.msra.mxu0 0.0
  %1353 = vmatprep.mubr.f32.mxu0 0.0
  %1354 = vmatmul.mubr.f32.gmra.mrb[0].mxu0 %v1287
  %v1355 = vpop.f32.mrb[0].mxu0
  %v1356 = vadd.f32 %v1282, %v1355
  %v1357 = vpop.f32.mrb[0].mxu0
  %v1358 = vadd.f32 %v1284, %v1357
  %1359 = vdwg.mxu0
  %v1360 = vxor.u32 %v1356, 2147483648
  %v1361 = vmul.f32 %v1360, 1.442695
  %v1362 = vpow.pop %v1361
  %v1363 = vadd.f32 %v1362, 1.0
  %v1364 = vrcp.pop %v1363
  %v1365 = vmul.f32 1.0, %v1364
  %v1366 = vtanh.pop %v1358
  %v1367 = vxor.u32 %v1358, 2147483648
  %v1368 = vmul.f32 %v1367, 1.442695
  %v1369 = vpow.pop %v1368
  %v1370 = vadd.f32 %v1369, 1.0
  %v1371 = vrcp.pop %v1370
  %v1372 = vmul.f32 1.0, %v1371
  %v1373 = vmul.f32 %v1365, %v1275
  %v1374 = vmul.f32 %v1365, %v1366
  %1376 = vrot.lane.b32.xlu0 %v1374, 64
  %v1377 = vpop.permute.xlu0 %1376
  %v1379 = vadd.f32 %v1373, %v1377
  %v1380 = vtanh.pop %v1379
  %v1381 = vmul.f32 %v1372, %v1380
  %1383 = vrot.lane.b32.xlu0 %v1381, 64
  %v1384 = vpop.permute.xlu0 %1383
  %v1385 = vrot.slane %v1161, 2
  %v1386 = vrot.slane %v1167, 1
  %v1387 = vsel %vm1176, %v1386, %v1385
  %v1388 = vrot.slane %v1163, 2
  %v1389 = vrot.slane %v1169, 1
  %v1390 = vsel %vm1176, %v1389, %v1388
  %v1393 = vsel %vm909, %v1384, 0
  %1395 = vmatprep.subr.mxu0 %v35
  %1396 = vmatpush1.msra.mxu0 %v34
  %1397 = vmatprep.subr.mxu0 %v41
  %1398 = vmatpush1.msra.mxu0 %v40
  %1399 = vmatprep.subr.mxu0 %v47
  %1400 = vmatpush1.msra.mxu0 %v46
  %1401 = vmatprep.subr.mxu0 %v53
  %1402 = vmatpush1.msra.mxu0 %v52
  %1403 = vmatprep.subr.mxu0 %v59
  %1404 = vmatpush1.msra.mxu0 %v58
  %1405 = vmatprep.subr.mxu0 %v65
  %1406 = vmatpush1.msra.mxu0 %v64
  %1407 = vmatprep.subr.mxu0 %v71
  %1408 = vmatpush1.msra.mxu0 %v70
  %1409 = vmatprep.subr.mxu0 %v77
  %1410 = vmatpush1.msra.mxu0 %v76
  %1411 = vmatprep.subr.mxu0 0.0
  %1412 = vmatpush1.msra.mxu0 0.0
  %1413 = vmatprep.subr.mxu0 0.0
  %1414 = vmatpush1.msra.mxu0 0.0
  %1415 = vmatprep.subr.mxu0 0.0
  %1416 = vmatpush1.msra.mxu0 0.0
  %1417 = vmatprep.subr.mxu0 0.0
  %1418 = vmatpush1.msra.mxu0 0.0
  %1419 = vmatprep.subr.mxu0 0.0
  %1420 = vmatpush1.msra.mxu0 0.0
  %1421 = vmatprep.subr.mxu0 0.0
  %1422 = vmatpush1.msra.mxu0 0.0
  %1423 = vmatprep.subr.mxu0 0.0
  %1424 = vmatpush1.msra.mxu0 0.0
  %1425 = vmatprep.subr.mxu0 0.0
  %1426 = vmatpush1.msra.mxu0 0.0
  %1427 = vmatprep.subr.mxu0 0.0
  %1428 = vmatpush1.msra.mxu0 0.0
  %1429 = vmatprep.subr.mxu0 0.0
  %1430 = vmatpush1.msra.mxu0 0.0
  %1431 = vmatprep.subr.mxu0 0.0
  %1432 = vmatpush1.msra.mxu0 0.0
  %1433 = vmatprep.subr.mxu0 0.0
  %1434 = vmatpush1.msra.mxu0 0.0
  %1435 = vmatprep.subr.mxu0 0.0
  %1436 = vmatpush1.msra.mxu0 0.0
  %1437 = vmatprep.subr.mxu0 0.0
  %1438 = vmatpush1.msra.mxu0 0.0
  %1439 = vmatprep.subr.mxu0 0.0
  %1440 = vmatpush1.msra.mxu0 0.0
  %1441 = vmatprep.subr.mxu0 0.0
  %1442 = vmatpush1.msra.mxu0 0.0
  %1443 = vmatprep.subr.mxu0 0.0
  %1444 = vmatpush1.msra.mxu0 0.0
  %1445 = vmatprep.subr.mxu0 0.0
  %1446 = vmatpush1.msra.mxu0 0.0
  %1447 = vmatprep.subr.mxu0 0.0
  %1448 = vmatpush1.msra.mxu0 0.0
  %1449 = vmatprep.subr.mxu0 0.0
  %1450 = vmatpush1.msra.mxu0 0.0
  %1451 = vmatprep.subr.mxu0 0.0
  %1452 = vmatpush1.msra.mxu0 0.0
  %1453 = vmatprep.subr.mxu0 0.0
  %1454 = vmatpush1.msra.mxu0 0.0
  %1455 = vmatprep.subr.mxu0 0.0
  %1456 = vmatpush1.msra.mxu0 0.0
  %1457 = vmatprep.subr.mxu0 0.0
  %1458 = vmatpush1.msra.mxu0 0.0
  %1459 = vmatprep.mubr.f32.mxu0 0.0
  %1460 = vmatmul.mubr.f32.gmra.mrb[0].mxu0 %v1393
  %v1461 = vpop.f32.mrb[0].mxu0
  %v1462 = vadd.f32 %v1387, %v1461
  %v1463 = vpop.f32.mrb[0].mxu0
  %v1464 = vadd.f32 %v1390, %v1463
  %1465 = vdwg.mxu0
  %v1466 = vxor.u32 %v1462, 2147483648
  %v1467 = vmul.f32 %v1466, 1.442695
  %v1468 = vpow.pop %v1467
  %v1469 = vadd.f32 %v1468, 1.0
  %v1470 = vrcp.pop %v1469
  %v1471 = vmul.f32 1.0, %v1470
  %v1472 = vtanh.pop %v1464
  %v1473 = vxor.u32 %v1464, 2147483648
  %v1474 = vmul.f32 %v1473, 1.442695
  %v1475 = vpow.pop %v1474
  %v1476 = vadd.f32 %v1475, 1.0
  %v1477 = vrcp.pop %v1476
  %v1478 = vmul.f32 1.0, %v1477
  %v1479 = vmul.f32 %v1471, %v1379
  %v1480 = vmul.f32 %v1471, %v1472
  %1482 = vrot.lane.b32.xlu0 %v1480, 64
  %v1483 = vpop.permute.xlu0 %1482
  %v1485 = vadd.f32 %v1479, %v1483
  %v1486 = vtanh.pop %v1485
  %v1487 = vmul.f32 %v1478, %v1486
  %1489 = vrot.lane.b32.xlu0 %v1487, 64
  %v1490 = vpop.permute.xlu0 %1489
  %v1491 = vrot.slane %v1161, 3
  %v1492 = vrot.slane %v1167, 2
  %v1493 = vsel %vm1176, %v1492, %v1491
  %v1494 = vrot.slane %v1163, 3
  %v1495 = vrot.slane %v1169, 2
  %v1496 = vsel %vm1176, %v1495, %v1494
  %v1499 = vsel %vm909, %v1490, 0
  %1501 = vmatprep.subr.mxu0 %v35
  %1502 = vmatpush1.msra.mxu0 %v34
  %1503 = vmatprep.subr.mxu0 %v41
  %1504 = vmatpush1.msra.mxu0 %v40
  %1505 = vmatprep.subr.mxu0 %v47
  %1506 = vmatpush1.msra.mxu0 %v46
  %1507 = vmatprep.subr.mxu0 %v53
  %1508 = vmatpush1.msra.mxu0 %v52
  %1509 = vmatprep.subr.mxu0 %v59
  %1510 = vmatpush1.msra.mxu0 %v58
  %1511 = vmatprep.subr.mxu0 %v65
  %1512 = vmatpush1.msra.mxu0 %v64
  %1513 = vmatprep.subr.mxu0 %v71
  %1514 = vmatpush1.msra.mxu0 %v70
  %1515 = vmatprep.subr.mxu0 %v77
  %1516 = vmatpush1.msra.mxu0 %v76
  %1517 = vmatprep.subr.mxu0 0.0
  %1518 = vmatpush1.msra.mxu0 0.0
  %1519 = vmatprep.subr.mxu0 0.0
  %1520 = vmatpush1.msra.mxu0 0.0
  %1521 = vmatprep.subr.mxu0 0.0
  %1522 = vmatpush1.msra.mxu0 0.0
  %1523 = vmatprep.subr.mxu0 0.0
  %1524 = vmatpush1.msra.mxu0 0.0
  %1525 = vmatprep.subr.mxu0 0.0
  %1526 = vmatpush1.msra.mxu0 0.0
  %1527 = vmatprep.subr.mxu0 0.0
  %1528 = vmatpush1.msra.mxu0 0.0
  %1529 = vmatprep.subr.mxu0 0.0
  %1530 = vmatpush1.msra.mxu0 0.0
  %1531 = vmatprep.subr.mxu0 0.0
  %1532 = vmatpush1.msra.mxu0 0.0
  %1533 = vmatprep.subr.mxu0 0.0
  %1534 = vmatpush1.msra.mxu0 0.0
  %1535 = vmatprep.subr.mxu0 0.0
  %1536 = vmatpush1.msra.mxu0 0.0
  %1537 = vmatprep.subr.mxu0 0.0
  %1538 = vmatpush1.msra.mxu0 0.0
  %1539 = vmatprep.subr.mxu0 0.0
  %1540 = vmatpush1.msra.mxu0 0.0
  %1541 = vmatprep.subr.mxu0 0.0
  %1542 = vmatpush1.msra.mxu0 0.0
  %1543 = vmatprep.subr.mxu0 0.0
  %1544 = vmatpush1.msra.mxu0 0.0
  %1545 = vmatprep.subr.mxu0 0.0
  %1546 = vmatpush1.msra.mxu0 0.0
  %1547 = vmatprep.subr.mxu0 0.0
  %1548 = vmatpush1.msra.mxu0 0.0
  %1549 = vmatprep.subr.mxu0 0.0
  %1550 = vmatpush1.msra.mxu0 0.0
  %1551 = vmatprep.subr.mxu0 0.0
  %1552 = vmatpush1.msra.mxu0 0.0
  %1553 = vmatprep.subr.mxu0 0.0
  %1554 = vmatpush1.msra.mxu0 0.0
  %1555 = vmatprep.subr.mxu0 0.0
  %1556 = vmatpush1.msra.mxu0 0.0
  %1557 = vmatprep.subr.mxu0 0.0
  %1558 = vmatpush1.msra.mxu0 0.0
  %1559 = vmatprep.subr.mxu0 0.0
  %1560 = vmatpush1.msra.mxu0 0.0
  %1561 = vmatprep.subr.mxu0 0.0
  %1562 = vmatpush1.msra.mxu0 0.0
  %1563 = vmatprep.subr.mxu0 0.0
  %1564 = vmatpush1.msra.mxu0 0.0
  %1565 = vmatprep.mubr.f32.mxu0 0.0
  %1566 = vmatmul.mubr.f32.gmra.mrb[0].mxu0 %v1499
  %v1567 = vpop.f32.mrb[0].mxu0
  %v1568 = vadd.f32 %v1493, %v1567
  %v1569 = vpop.f32.mrb[0].mxu0
  %v1570 = vadd.f32 %v1496, %v1569
  %1571 = vdwg.mxu0
  %v1572 = vxor.u32 %v1568, 2147483648
  %v1573 = vmul.f32 %v1572, 1.442695
  %v1574 = vpow.pop %v1573
  %v1575 = vadd.f32 %v1574, 1.0
  %v1576 = vrcp.pop %v1575
  %v1577 = vmul.f32 1.0, %v1576
  %v1578 = vtanh.pop %v1570
  %v1579 = vxor.u32 %v1570, 2147483648
  %v1580 = vmul.f32 %v1579, 1.442695
  %v1581 = vpow.pop %v1580
  %v1582 = vadd.f32 %v1581, 1.0
  %v1583 = vrcp.pop %v1582
  %v1584 = vmul.f32 1.0, %v1583
  %v1585 = vmul.f32 %v1577, %v1485
  %v1586 = vmul.f32 %v1577, %v1578
  %1588 = vrot.lane.b32.xlu0 %v1586, 64
  %v1589 = vpop.permute.xlu0 %1588
  %v1591 = vadd.f32 %v1585, %v1589
  %v1592 = vtanh.pop %v1591
  %v1593 = vmul.f32 %v1584, %v1592
  %1595 = vrot.lane.b32.xlu0 %v1593, 64
  %v1596 = vpop.permute.xlu0 %1595
  %v1597 = vrot.slane %v1161, 4
  %v1598 = vrot.slane %v1167, 3
  %v1599 = vsel %vm1176, %v1598, %v1597
  %v1600 = vrot.slane %v1163, 4
  %v1601 = vrot.slane %v1169, 3
  %v1602 = vsel %vm1176, %v1601, %v1600
  %v1605 = vsel %vm909, %v1596, 0
  %1607 = vmatprep.subr.mxu0 %v35
  %1608 = vmatpush1.msra.mxu0 %v34
  %1609 = vmatprep.subr.mxu0 %v41
  %1610 = vmatpush1.msra.mxu0 %v40
  %1611 = vmatprep.subr.mxu0 %v47
  %1612 = vmatpush1.msra.mxu0 %v46
  %1613 = vmatprep.subr.mxu0 %v53
  %1614 = vmatpush1.msra.mxu0 %v52
  %1615 = vmatprep.subr.mxu0 %v59
  %1616 = vmatpush1.msra.mxu0 %v58
  %1617 = vmatprep.subr.mxu0 %v65
  %1618 = vmatpush1.msra.mxu0 %v64
  %1619 = vmatprep.subr.mxu0 %v71
  %1620 = vmatpush1.msra.mxu0 %v70
  %1621 = vmatprep.subr.mxu0 %v77
  %1622 = vmatpush1.msra.mxu0 %v76
  %1623 = vmatprep.subr.mxu0 0.0
  %1624 = vmatpush1.msra.mxu0 0.0
  %1625 = vmatprep.subr.mxu0 0.0
  %1626 = vmatpush1.msra.mxu0 0.0
  %1627 = vmatprep.subr.mxu0 0.0
  %1628 = vmatpush1.msra.mxu0 0.0
  %1629 = vmatprep.subr.mxu0 0.0
  %1630 = vmatpush1.msra.mxu0 0.0
  %1631 = vmatprep.subr.mxu0 0.0
  %1632 = vmatpush1.msra.mxu0 0.0
  %1633 = vmatprep.subr.mxu0 0.0
  %1634 = vmatpush1.msra.mxu0 0.0
  %1635 = vmatprep.subr.mxu0 0.0
  %1636 = vmatpush1.msra.mxu0 0.0
  %1637 = vmatprep.subr.mxu0 0.0
  %1638 = vmatpush1.msra.mxu0 0.0
  %1639 = vmatprep.subr.mxu0 0.0
  %1640 = vmatpush1.msra.mxu0 0.0
  %1641 = vmatprep.subr.mxu0 0.0
  %1642 = vmatpush1.msra.mxu0 0.0
  %1643 = vmatprep.subr.mxu0 0.0
  %1644 = vmatpush1.msra.mxu0 0.0
  %1645 = vmatprep.subr.mxu0 0.0
  %1646 = vmatpush1.msra.mxu0 0.0
  %1647 = vmatprep.subr.mxu0 0.0
  %1648 = vmatpush1.msra.mxu0 0.0
  %1649 = vmatprep.subr.mxu0 0.0
  %1650 = vmatpush1.msra.mxu0 0.0
  %1651 = vmatprep.subr.mxu0 0.0
  %1652 = vmatpush1.msra.mxu0 0.0
  %1653 = vmatprep.subr.mxu0 0.0
  %1654 = vmatpush1.msra.mxu0 0.0
  %1655 = vmatprep.subr.mxu0 0.0
  %1656 = vmatpush1.msra.mxu0 0.0
  %1657 = vmatprep.subr.mxu0 0.0
  %1658 = vmatpush1.msra.mxu0 0.0
  %1659 = vmatprep.subr.mxu0 0.0
  %1660 = vmatpush1.msra.mxu0 0.0
  %1661 = vmatprep.subr.mxu0 0.0
  %1662 = vmatpush1.msra.mxu0 0.0
  %1663 = vmatprep.subr.mxu0 0.0
  %1664 = vmatpush1.msra.mxu0 0.0
  %1665 = vmatprep.subr.mxu0 0.0
  %1666 = vmatpush1.msra.mxu0 0.0
  %1667 = vmatprep.subr.mxu0 0.0
  %1668 = vmatpush1.msra.mxu0 0.0
  %1669 = vmatprep.subr.mxu0 0.0
  %1670 = vmatpush1.msra.mxu0 0.0
  %1671 = vmatprep.mubr.f32.mxu0 0.0
  %1672 = vmatmul.mubr.f32.gmra.mrb[0].mxu0 %v1605
  %v1673 = vpop.f32.mrb[0].mxu0
  %v1674 = vadd.f32 %v1599, %v1673
  %v1675 = vpop.f32.mrb[0].mxu0
  %v1676 = vadd.f32 %v1602, %v1675
  %1677 = vdwg.mxu0
  %v1678 = vxor.u32 %v1674, 2147483648
  %v1679 = vmul.f32 %v1678, 1.442695
  %v1680 = vpow.pop %v1679
  %v1681 = vadd.f32 %v1680, 1.0
  %v1682 = vrcp.pop %v1681
  %v1683 = vmul.f32 1.0, %v1682
  %v1684 = vtanh.pop %v1676
  %v1685 = vxor.u32 %v1676, 2147483648
  %v1686 = vmul.f32 %v1685, 1.442695
  %v1687 = vpow.pop %v1686
  %v1688 = vadd.f32 %v1687, 1.0
  %v1689 = vrcp.pop %v1688
  %v1690 = vmul.f32 1.0, %v1689
  %v1691 = vmul.f32 %v1683, %v1591
  %v1692 = vmul.f32 %v1683, %v1684
  %1694 = vrot.lane.b32.xlu0 %v1692, 64
  %v1695 = vpop.permute.xlu0 %1694
  %v1697 = vadd.f32 %v1691, %v1695
  %v1698 = vtanh.pop %v1697
  %v1699 = vmul.f32 %v1690, %v1698
  %1701 = vrot.lane.b32.xlu0 %v1699, 64
  %v1702 = vpop.permute.xlu0 %1701
  %v1703 = vrot.slane %v1161, 5
  %v1704 = vrot.slane %v1167, 4
  %v1705 = vsel %vm1176, %v1704, %v1703
  %v1706 = vrot.slane %v1163, 5
  %v1707 = vrot.slane %v1169, 4
  %v1708 = vsel %vm1176, %v1707, %v1706
  %v1711 = vsel %vm909, %v1702, 0
  %1713 = vmatprep.subr.mxu0 %v35
  %1714 = vmatpush1.msra.mxu0 %v34
  %1715 = vmatprep.subr.mxu0 %v41
  %1716 = vmatpush1.msra.mxu0 %v40
  %1717 = vmatprep.subr.mxu0 %v47
  %1718 = vmatpush1.msra.mxu0 %v46
  %1719 = vmatprep.subr.mxu0 %v53
  %1720 = vmatpush1.msra.mxu0 %v52
  %1721 = vmatprep.subr.mxu0 %v59
  %1722 = vmatpush1.msra.mxu0 %v58
  %1723 = vmatprep.subr.mxu0 %v65
  %1724 = vmatpush1.msra.mxu0 %v64
  %1725 = vmatprep.subr.mxu0 %v71
  %1726 = vmatpush1.msra.mxu0 %v70
  %1727 = vmatprep.subr.mxu0 %v77
  %1728 = vmatpush1.msra.mxu0 %v76
  %1729 = vmatprep.subr.mxu0 0.0
  %1730 = vmatpush1.msra.mxu0 0.0
  %1731 = vmatprep.subr.mxu0 0.0
  %1732 = vmatpush1.msra.mxu0 0.0
  %1733 = vmatprep.subr.mxu0 0.0
  %1734 = vmatpush1.msra.mxu0 0.0
  %1735 = vmatprep.subr.mxu0 0.0
  %1736 = vmatpush1.msra.mxu0 0.0
  %1737 = vmatprep.subr.mxu0 0.0
  %1738 = vmatpush1.msra.mxu0 0.0
  %1739 = vmatprep.subr.mxu0 0.0
  %1740 = vmatpush1.msra.mxu0 0.0
  %1741 = vmatprep.subr.mxu0 0.0
  %1742 = vmatpush1.msra.mxu0 0.0
  %1743 = vmatprep.subr.mxu0 0.0
  %1744 = vmatpush1.msra.mxu0 0.0
  %1745 = vmatprep.subr.mxu0 0.0
  %1746 = vmatpush1.msra.mxu0 0.0
  %1747 = vmatprep.subr.mxu0 0.0
  %1748 = vmatpush1.msra.mxu0 0.0
  %1749 = vmatprep.subr.mxu0 0.0
  %1750 = vmatpush1.msra.mxu0 0.0
  %1751 = vmatprep.subr.mxu0 0.0
  %1752 = vmatpush1.msra.mxu0 0.0
  %1753 = vmatprep.subr.mxu0 0.0
  %1754 = vmatpush1.msra.mxu0 0.0
  %1755 = vmatprep.subr.mxu0 0.0
  %1756 = vmatpush1.msra.mxu0 0.0
  %1757 = vmatprep.subr.mxu0 0.0
  %1758 = vmatpush1.msra.mxu0 0.0
  %1759 = vmatprep.subr.mxu0 0.0
  %1760 = vmatpush1.msra.mxu0 0.0
  %1761 = vmatprep.subr.mxu0 0.0
  %1762 = vmatpush1.msra.mxu0 0.0
  %1763 = vmatprep.subr.mxu0 0.0
  %1764 = vmatpush1.msra.mxu0 0.0
  %1765 = vmatprep.subr.mxu0 0.0
  %1766 = vmatpush1.msra.mxu0 0.0
  %1767 = vmatprep.subr.mxu0 0.0
  %1768 = vmatpush1.msra.mxu0 0.0
  %1769 = vmatprep.subr.mxu0 0.0
  %1770 = vmatpush1.msra.mxu0 0.0
  %1771 = vmatprep.subr.mxu0 0.0
  %1772 = vmatpush1.msra.mxu0 0.0
  %1773 = vmatprep.subr.mxu0 0.0
  %1774 = vmatpush1.msra.mxu0 0.0
  %1775 = vmatprep.subr.mxu0 0.0
  %1776 = vmatpush1.msra.mxu0 0.0
  %1777 = vmatprep.mubr.f32.mxu0 0.0
  %1778 = vmatmul.mubr.f32.gmra.mrb[0].mxu0 %v1711
  %v1779 = vpop.f32.mrb[0].mxu0
  %v1780 = vadd.f32 %v1705, %v1779
  %v1781 = vpop.f32.mrb[0].mxu0
  %v1782 = vadd.f32 %v1708, %v1781
  %1783 = vdwg.mxu0
  %v1784 = vxor.u32 %v1780, 2147483648
  %v1785 = vmul.f32 %v1784, 1.442695
  %v1786 = vpow.pop %v1785
  %v1787 = vadd.f32 %v1786, 1.0
  %v1788 = vrcp.pop %v1787
  %v1789 = vmul.f32 1.0, %v1788
  %v1790 = vtanh.pop %v1782
  %v1791 = vxor.u32 %v1782, 2147483648
  %v1792 = vmul.f32 %v1791, 1.442695
  %v1793 = vpow.pop %v1792
  %v1794 = vadd.f32 %v1793, 1.0
  %v1795 = vrcp.pop %v1794
  %v1796 = vmul.f32 1.0, %v1795
  %v1797 = vmul.f32 %v1789, %v1697
  %v1798 = vmul.f32 %v1789, %v1790
  %1800 = vrot.lane.b32.xlu0 %v1798, 64
  %v1801 = vpop.permute.xlu0 %1800
  %v1803 = vadd.f32 %v1797, %v1801
  %v1804 = vtanh.pop %v1803
  %v1805 = vmul.f32 %v1796, %v1804
  %1807 = vrot.lane.b32.xlu0 %v1805, 64
  %v1808 = vpop.permute.xlu0 %1807
  %v1809 = vrot.slane %v1161, 6
  %v1810 = vrot.slane %v1167, 5
  %v1811 = vsel %vm1176, %v1810, %v1809
  %v1812 = vrot.slane %v1163, 6
  %v1813 = vrot.slane %v1169, 5
  %v1814 = vsel %vm1176, %v1813, %v1812
  %v1817 = vsel %vm909, %v1808, 0
  %1819 = vmatprep.subr.mxu0 %v35
  %1820 = vmatpush1.msra.mxu0 %v34
  %1821 = vmatprep.subr.mxu0 %v41
  %1822 = vmatpush1.msra.mxu0 %v40
  %1823 = vmatprep.subr.mxu0 %v47
  %1824 = vmatpush1.msra.mxu0 %v46
  %1825 = vmatprep.subr.mxu0 %v53
  %1826 = vmatpush1.msra.mxu0 %v52
  %1827 = vmatprep.subr.mxu0 %v59
  %1828 = vmatpush1.msra.mxu0 %v58
  %1829 = vmatprep.subr.mxu0 %v65
  %1830 = vmatpush1.msra.mxu0 %v64
  %1831 = vmatprep.subr.mxu0 %v71
  %1832 = vmatpush1.msra.mxu0 %v70
  %1833 = vmatprep.subr.mxu0 %v77
  %1834 = vmatpush1.msra.mxu0 %v76
  %1835 = vmatprep.subr.mxu0 0.0
  %1836 = vmatpush1.msra.mxu0 0.0
  %1837 = vmatprep.subr.mxu0 0.0
  %1838 = vmatpush1.msra.mxu0 0.0
  %1839 = vmatprep.subr.mxu0 0.0
  %1840 = vmatpush1.msra.mxu0 0.0
  %1841 = vmatprep.subr.mxu0 0.0
  %1842 = vmatpush1.msra.mxu0 0.0
  %1843 = vmatprep.subr.mxu0 0.0
  %1844 = vmatpush1.msra.mxu0 0.0
  %1845 = vmatprep.subr.mxu0 0.0
  %1846 = vmatpush1.msra.mxu0 0.0
  %1847 = vmatprep.subr.mxu0 0.0
  %1848 = vmatpush1.msra.mxu0 0.0
  %1849 = vmatprep.subr.mxu0 0.0
  %1850 = vmatpush1.msra.mxu0 0.0
  %1851 = vmatprep.subr.mxu0 0.0
  %1852 = vmatpush1.msra.mxu0 0.0
  %1853 = vmatprep.subr.mxu0 0.0
  %1854 = vmatpush1.msra.mxu0 0.0
  %1855 = vmatprep.subr.mxu0 0.0
  %1856 = vmatpush1.msra.mxu0 0.0
  %1857 = vmatprep.subr.mxu0 0.0
  %1858 = vmatpush1.msra.mxu0 0.0
  %1859 = vmatprep.subr.mxu0 0.0
  %1860 = vmatpush1.msra.mxu0 0.0
  %1861 = vmatprep.subr.mxu0 0.0
  %1862 = vmatpush1.msra.mxu0 0.0
  %1863 = vmatprep.subr.mxu0 0.0
  %1864 = vmatpush1.msra.mxu0 0.0
  %1865 = vmatprep.subr.mxu0 0.0
  %1866 = vmatpush1.msra.mxu0 0.0
  %1867 = vmatprep.subr.mxu0 0.0
  %1868 = vmatpush1.msra.mxu0 0.0
  %1869 = vmatprep.subr.mxu0 0.0
  %1870 = vmatpush1.msra.mxu0 0.0
  %1871 = vmatprep.subr.mxu0 0.0
  %1872 = vmatpush1.msra.mxu0 0.0
  %1873 = vmatprep.subr.mxu0 0.0
  %1874 = vmatpush1.msra.mxu0 0.0
  %1875 = vmatprep.subr.mxu0 0.0
  %1876 = vmatpush1.msra.mxu0 0.0
  %1877 = vmatprep.subr.mxu0 0.0
  %1878 = vmatpush1.msra.mxu0 0.0
  %1879 = vmatprep.subr.mxu0 0.0
  %1880 = vmatpush1.msra.mxu0 0.0
  %1881 = vmatprep.subr.mxu0 0.0
  %1882 = vmatpush1.msra.mxu0 0.0
  %1883 = vmatprep.mubr.f32.mxu0 0.0
  %1884 = vmatmul.mubr.f32.gmra.mrb[0].mxu0 %v1817
  %v1885 = vpop.f32.mrb[0].mxu0
  %v1886 = vadd.f32 %v1811, %v1885
  %v1887 = vpop.f32.mrb[0].mxu0
  %v1888 = vadd.f32 %v1814, %v1887
  %1889 = vdwg.mxu0
  %v1890 = vxor.u32 %v1886, 2147483648
  %v1891 = vmul.f32 %v1890, 1.442695
  %v1892 = vpow.pop %v1891
  %v1893 = vadd.f32 %v1892, 1.0
  %v1894 = vrcp.pop %v1893
  %v1895 = vmul.f32 1.0, %v1894
  %v1896 = vtanh.pop %v1888
  %v1897 = vxor.u32 %v1888, 2147483648
  %v1898 = vmul.f32 %v1897, 1.442695
  %v1899 = vpow.pop %v1898
  %v1900 = vadd.f32 %v1899, 1.0
  %v1901 = vrcp.pop %v1900
  %v1902 = vmul.f32 1.0, %v1901
  %v1903 = vmul.f32 %v1895, %v1803
  %v1904 = vmul.f32 %v1895, %v1896
  %1906 = vrot.lane.b32.xlu0 %v1904, 64
  %v1907 = vpop.permute.xlu0 %1906
  %v1909 = vadd.f32 %v1903, %v1907
  %v1910 = vtanh.pop %v1909
  %v1911 = vmul.f32 %v1902, %v1910
  %1913 = vrot.lane.b32.xlu0 %v1911, 64
  %v1914 = vpop.permute.xlu0 %1913
  %v1915 = vrot.slane %v1161, 7
  %v1916 = vrot.slane %v1167, 6
  %v1917 = vsel %vm1176, %v1916, %v1915
  %v1918 = vrot.slane %v1163, 7
  %v1919 = vrot.slane %v1169, 6
  %v1920 = vsel %vm1176, %v1919, %v1918
  %v1923 = vsel %vm909, %v1914, 0
  %1925 = vmatprep.subr.mxu0 %v35
  %1926 = vmatpush1.msra.mxu0 %v34
  %1927 = vmatprep.subr.mxu0 %v41
  %1928 = vmatpush1.msra.mxu0 %v40
  %1929 = vmatprep.subr.mxu0 %v47
  %1930 = vmatpush1.msra.mxu0 %v46
  %1931 = vmatprep.subr.mxu0 %v53
  %1932 = vmatpush1.msra.mxu0 %v52
  %1933 = vmatprep.subr.mxu0 %v59
  %1934 = vmatpush1.msra.mxu0 %v58
  %1935 = vmatprep.subr.mxu0 %v65
  %1936 = vmatpush1.msra.mxu0 %v64
  %1937 = vmatprep.subr.mxu0 %v71
  %1938 = vmatpush1.msra.mxu0 %v70
  %1939 = vmatprep.subr.mxu0 %v77
  %1940 = vmatpush1.msra.mxu0 %v76
  %1941 = vmatprep.subr.mxu0 0.0
  %1942 = vmatpush1.msra.mxu0 0.0
  %1943 = vmatprep.subr.mxu0 0.0
  %1944 = vmatpush1.msra.mxu0 0.0
  %1945 = vmatprep.subr.mxu0 0.0
  %1946 = vmatpush1.msra.mxu0 0.0
  %1947 = vmatprep.subr.mxu0 0.0
  %1948 = vmatpush1.msra.mxu0 0.0
  %1949 = vmatprep.subr.mxu0 0.0
  %1950 = vmatpush1.msra.mxu0 0.0
  %1951 = vmatprep.subr.mxu0 0.0
  %1952 = vmatpush1.msra.mxu0 0.0
  %1953 = vmatprep.subr.mxu0 0.0
  %1954 = vmatpush1.msra.mxu0 0.0
  %1955 = vmatprep.subr.mxu0 0.0
  %1956 = vmatpush1.msra.mxu0 0.0
  %1957 = vmatprep.subr.mxu0 0.0
  %1958 = vmatpush1.msra.mxu0 0.0
  %1959 = vmatprep.subr.mxu0 0.0
  %1960 = vmatpush1.msra.mxu0 0.0
  %1961 = vmatprep.subr.mxu0 0.0
  %1962 = vmatpush1.msra.mxu0 0.0
  %1963 = vmatprep.subr.mxu0 0.0
  %1964 = vmatpush1.msra.mxu0 0.0
  %1965 = vmatprep.subr.mxu0 0.0
  %1966 = vmatpush1.msra.mxu0 0.0
  %1967 = vmatprep.subr.mxu0 0.0
  %1968 = vmatpush1.msra.mxu0 0.0
  %1969 = vmatprep.subr.mxu0 0.0
  %1970 = vmatpush1.msra.mxu0 0.0
  %1971 = vmatprep.subr.mxu0 0.0
  %1972 = vmatpush1.msra.mxu0 0.0
  %1973 = vmatprep.subr.mxu0 0.0
  %1974 = vmatpush1.msra.mxu0 0.0
  %1975 = vmatprep.subr.mxu0 0.0
  %1976 = vmatpush1.msra.mxu0 0.0
  %1977 = vmatprep.subr.mxu0 0.0
  %1978 = vmatpush1.msra.mxu0 0.0
  %1979 = vmatprep.subr.mxu0 0.0
  %1980 = vmatpush1.msra.mxu0 0.0
  %1981 = vmatprep.subr.mxu0 0.0
  %1982 = vmatpush1.msra.mxu0 0.0
  %1983 = vmatprep.subr.mxu0 0.0
  %1984 = vmatpush1.msra.mxu0 0.0
  %1985 = vmatprep.subr.mxu0 0.0
  %1986 = vmatpush1.msra.mxu0 0.0
  %1987 = vmatprep.subr.mxu0 0.0
  %1988 = vmatpush1.msra.mxu0 0.0
  %1989 = vmatprep.mubr.f32.mxu0 0.0
  %1990 = vmatmul.mubr.f32.gmra.mrb[0].mxu0 %v1923
  %v1991 = vpop.f32.mrb[0].mxu0
  %v1992 = vadd.f32 %v1917, %v1991
  %v1993 = vpop.f32.mrb[0].mxu0
  %v1994 = vadd.f32 %v1920, %v1993
  %1995 = vdwg.mxu0
  %v1996 = vxor.u32 %v1992, 2147483648
  %v1997 = vmul.f32 %v1996, 1.442695
  %v1998 = vpow.pop %v1997
  %v1999 = vadd.f32 %v1998, 1.0
  %v2000 = vrcp.pop %v1999
  %v2001 = vmul.f32 1.0, %v2000
  %v2002 = vtanh.pop %v1994
  %v2003 = vxor.u32 %v1994, 2147483648
  %v2004 = vmul.f32 %v2003, 1.442695
  %v2005 = vpow.pop %v2004
  %v2006 = vadd.f32 %v2005, 1.0
  %v2007 = vrcp.pop %v2006
  %v2008 = vmul.f32 1.0, %v2007
  %v2009 = vmul.f32 %v2001, %v1909
  %v2010 = vmul.f32 %v2001, %v2002
  %2012 = vrot.lane.b32.xlu0 %v2010, 64
  %v2013 = vpop.permute.xlu0 %2012
  %v2015 = vadd.f32 %v2009, %v2013
  %v2016 = vtanh.pop %v2015
  %v2017 = vmul.f32 %v2008, %v2016
  %2020 = vrot.lane.b32.xlu0 %v2017, 64
  %v2021 = vpop.permute.xlu0 %2020
  %v2023 = vsel %vm88, %v1280, %v2021
  %v2024 = vsel %vm1052, %v2023, 0.0
  %v2025 = vlaneseq
  %v2026 = vshrl.u32 %v2025, 7
  %v2027 = vsub.s32 0, %v2026
  %v2028 = vrot.slane %v83, %v2027
  %v2030 = vsel %vm909, %v2024, 0
  %2032 = vmatprep.subr.mxu0 0.0
  %2033 = vmatpush1.msra.mxu0 %v36
  %2034 = vmatprep.subr.mxu0 0.0
  %2035 = vmatpush1.msra.mxu0 %v42
  %2036 = vmatprep.subr.mxu0 0.0
  %2037 = vmatpush1.msra.mxu0 %v48
  %2038 = vmatprep.subr.mxu0 0.0
  %2039 = vmatpush1.msra.mxu0 %v54
  %2040 = vmatprep.subr.mxu0 0.0
  %2041 = vmatpush1.msra.mxu0 %v60
  %2042 = vmatprep.subr.mxu0 0.0
  %2043 = vmatpush1.msra.mxu0 %v66
  %2044 = vmatprep.subr.mxu0 0.0
  %2045 = vmatpush1.msra.mxu0 %v72
  %2046 = vmatprep.subr.mxu0 0.0
  %2047 = vmatpush1.msra.mxu0 %v78
  %2048 = vmatprep.subr.mxu0 0.0
  %2049 = vmatpush1.msra.mxu0 0.0
  %2050 = vmatprep.subr.mxu0 0.0
  %2051 = vmatpush1.msra.mxu0 0.0
  %2052 = vmatprep.subr.mxu0 0.0
  %2053 = vmatpush1.msra.mxu0 0.0
  %2054 = vmatprep.subr.mxu0 0.0
  %2055 = vmatpush1.msra.mxu0 0.0
  %2056 = vmatprep.subr.mxu0 0.0
  %2057 = vmatpush1.msra.mxu0 0.0
  %2058 = vmatprep.subr.mxu0 0.0
  %2059 = vmatpush1.msra.mxu0 0.0
  %2060 = vmatprep.subr.mxu0 0.0
  %2061 = vmatpush1.msra.mxu0 0.0
  %2062 = vmatprep.subr.mxu0 0.0
  %2063 = vmatpush1.msra.mxu0 0.0
  %2064 = vmatprep.subr.mxu0 0.0
  %2065 = vmatpush1.msra.mxu0 0.0
  %2066 = vmatprep.subr.mxu0 0.0
  %2067 = vmatpush1.msra.mxu0 0.0
  %2068 = vmatprep.subr.mxu0 0.0
  %2069 = vmatpush1.msra.mxu0 0.0
  %2070 = vmatprep.subr.mxu0 0.0
  %2071 = vmatpush1.msra.mxu0 0.0
  %2072 = vmatprep.subr.mxu0 0.0
  %2073 = vmatpush1.msra.mxu0 0.0
  %2074 = vmatprep.subr.mxu0 0.0
  %2075 = vmatpush1.msra.mxu0 0.0
  %2076 = vmatprep.subr.mxu0 0.0
  %2077 = vmatpush1.msra.mxu0 0.0
  %2078 = vmatprep.subr.mxu0 0.0
  %2079 = vmatpush1.msra.mxu0 0.0
  %2080 = vmatprep.subr.mxu0 0.0
  %2081 = vmatpush1.msra.mxu0 0.0
  %2082 = vmatprep.subr.mxu0 0.0
  %2083 = vmatpush1.msra.mxu0 0.0
  %2084 = vmatprep.subr.mxu0 0.0
  %2085 = vmatpush1.msra.mxu0 0.0
  %2086 = vmatprep.subr.mxu0 0.0
  %2087 = vmatpush1.msra.mxu0 0.0
  %2088 = vmatprep.subr.mxu0 0.0
  %2089 = vmatpush1.msra.mxu0 0.0
  %2090 = vmatprep.subr.mxu0 0.0
  %2091 = vmatpush1.msra.mxu0 0.0
  %2092 = vmatprep.subr.mxu0 0.0
  %2093 = vmatpush1.msra.mxu0 0.0
  %2094 = vmatprep.subr.mxu0 0.0
  %2095 = vmatpush1.msra.mxu0 0.0
  %2096 = vmatprep.mubr.f32.mxu0 0.0
  %2097 = vmatmul.mubr.f32.gmra.mrb[0].mxu0 %v2030
  %v2098 = vpop.f32.mrb[0].mxu0
  %v2099 = vadd.f32 %v2028, %v2098
  %v2100 = vpop.f32.mrb[0].mxu0
  %2101 = vdwg.mxu0
  %2102 = vst [vmem:[%s5] sm:$0xff] %v2099
  // Predicated region
  $region22: #{forward.1} parent=0 // pred_check
    _
  $region23: #{forward.1} parent=0 // pred_check_branch
    %2104 = sbr.rel (0) target = $region25
  $region24: #{forward.1} parent=0 // pred_region
    _
  $region25: #{forward.1} parent=0 // pred_fallthru
    _
  // Predicated region
  $region26: #{forward.1} parent=0 // pred_check
    _
  $region27: #{forward.1} parent=0 // pred_check_branch
    %2106 = sbr.rel (0) target = $region29
  $region28: #{forward.1} parent=0 // pred_region
    _
  $region29: #{forward.1} parent=0 // pred_fallthru
    _

</llo_original>
